<compile_context>
chip_gen: v7x
topology: tpu7x:2x2x1
jax: 0.10.0
libtpu: 0.0.40
codegen_flags: <defaults>
</compile_context>

<pallas_src>
import functools

import jax
import jax.numpy as jnp
from jax.experimental import pallas as pl
from jax.experimental.pallas import tpu as pltpu


_LANE = 128
_SUBLANE_BF16 = 16      # bf16 vregs pack [16, 128]
_NEG = -1e30            # finite sentinel for padded-row scores (never -inf)


def _round_up(n, m):
    return ((n + m - 1) // m) * m


def _pad2d(x, rows, cols):
    r, c = x.shape
    return jnp.pad(x, ((0, rows - r), (0, cols - c)))


def _temporal_attention_kernel(
    static_ref, temporal_ref,
    ws_ref, bs_ref, wt_ref, bt_ref,
    wsf_ref, wtf_ref, ba_ref, av_ref,
    bf_ref, gamma_ref, beta_ref,
    out_ref,
    m_ref, l_ref,
    *, hidden_pad, out_dim_true, batch_true, block_b,
):
    f32 = jnp.float32
    bf16 = jnp.bfloat16
    phase = pl.program_id(0)
    tile = pl.program_id(1)

    # Valid-row mask for this batch tile, generated in-kernel (no HBM input).
    row_ids = tile * block_b + jax.lax.broadcasted_iota(jnp.int32, (block_b, 1), 0)
    valid = row_ids < batch_true                        # [block_b, 1] bool
    valid_f = valid.astype(f32)

    # ---- shared prefix (both passes): projections + attention score --------
    h_s = jnp.dot(static_ref[...], ws_ref[...],
                  preferred_element_type=f32) + bs_ref[...]
    h_t = jnp.dot(temporal_ref[...], wt_ref[...],
                  preferred_element_type=f32) + bt_ref[...]

    # Fused second-stage matmuls: weights are [Wa1 | Wf1] and [Wa2 | Wf2]
    # (concatenated once, host-side). One N = Hp+Op MXU pass per LHS; the
    # split point Hp is a 128-lane boundary so the slices are free.
    p_s = jnp.dot(h_s.astype(bf16), wsf_ref[...], preferred_element_type=f32)
    p_t = jnp.dot(h_t.astype(bf16), wtf_ref[...], preferred_element_type=f32)

    attn_hidden = jnp.tanh(
        p_s[:, :hidden_pad] + p_t[:, :hidden_pad] + ba_ref[...])
    # Attention score via VPU multiply + lane reduce (avoids an N=1 MXU pass).
    score = jnp.sum(attn_hidden * av_ref[...], axis=-1, keepdims=True)
    score = jnp.where(valid, score, _NEG)

    # ---- pass 0: online softmax-over-batch statistics -----------------------
    @pl.when(jnp.logical_and(phase == 0, tile == 0))
    def _init():
        m_ref[...] = jnp.full_like(m_ref, _NEG)
        l_ref[...] = jnp.zeros_like(l_ref)

    @pl.when(phase == 0)
    def _accumulate():
        tile_max = jnp.max(score, axis=0, keepdims=True)            # [1, 1]
        m_old = m_ref[...]
        m_new = jnp.maximum(m_old, tile_max)
        l_ref[...] = (l_ref[...] * jnp.exp(m_old - m_new)
                      + jnp.sum(jnp.exp(score - m_new) * valid_f,
                                axis=0, keepdims=True))
        m_ref[...] = m_new

    # ---- pass 1: apply weights, fusion layer, LayerNorm, ReLU ---------------
    @pl.when(phase == 1)
    def _finalize():
        # Exact softmax normalisation (matches torch.softmax numerics).
        w = jnp.exp(score - m_ref[...]) / l_ref[...] * valid_f      # [block_b,1]

        # (h_t * w) @ Wf2 == w * (h_t @ Wf2) because w is a per-row scalar.
        fused = p_s[:, hidden_pad:] + w * p_t[:, hidden_pad:] + bf_ref[...]

        # LayerNorm over the TRUE output_dim lanes (eps = 1e-5, PyTorch
        # default). Padded lanes of `fused` are exactly zero by construction
        # (zero-padded Wf / bf), so the mean needs no mask; only `centered`
        # (which is -mean on padded lanes) is masked.
        opad = fused.shape[1]
        col_ids = jax.lax.broadcasted_iota(jnp.int32, (1, opad), 1)
        colmask = (col_ids < out_dim_true).astype(f32)
        inv_o = 1.0 / float(out_dim_true)
        mean = jnp.sum(fused, axis=-1, keepdims=True) * inv_o
        centered = (fused - mean) * colmask
        var = jnp.sum(centered * centered, axis=-1, keepdims=True) * inv_o
        normed = (centered * jax.lax.rsqrt(var + 1e-5) * gamma_ref[...]
                  + beta_ref[...])

        # ReLU (final Dropout is identity in eval mode).
        out_ref[...] = jnp.maximum(normed, 0.0).astype(out_ref.dtype)


def init_params(key, static_dim, temporal_dim, hidden_dim, output_dim):
    """Raw module parameters. PyTorch Linear weights are [out, in]; here they
    are stored pre-transposed as [in, out]; the 2H-input linears are split
    into two [H, out] halves so the concatenation is never materialized."""
    ks = jax.random.split(key, 12)
    s = 0.1
    return {
        "Ws": s * jax.random.normal(ks[0], (static_dim, hidden_dim), jnp.float32),
        "bs": s * jax.random.normal(ks[1], (1, hidden_dim), jnp.float32),
        "Wt": s * jax.random.normal(ks[2], (temporal_dim, hidden_dim), jnp.float32),
        "bt": s * jax.random.normal(ks[3], (1, hidden_dim), jnp.float32),
        "Wa1": s * jax.random.normal(ks[4], (hidden_dim, hidden_dim), jnp.float32),
        "Wa2": s * jax.random.normal(ks[5], (hidden_dim, hidden_dim), jnp.float32),
        "ba": s * jax.random.normal(ks[6], (1, hidden_dim), jnp.float32),
        "av": jax.random.normal(ks[7], (hidden_dim, 1), jnp.float32),
        "Wf1": s * jax.random.normal(ks[8], (hidden_dim, output_dim), jnp.float32),
        "Wf2": s * jax.random.normal(ks[9], (hidden_dim, output_dim), jnp.float32),
        "bf": s * jax.random.normal(ks[10], (1, output_dim), jnp.float32),
        "gamma": jnp.ones((1, output_dim), jnp.float32),
        "beta": jnp.zeros((1, output_dim), jnp.float32),
    }


_WEIGHT_ORDER = ("ws", "bs", "wt", "bt", "wsf", "wtf", "ba", "av",
                 "bf", "gamma", "beta")


def prepare_params(params):
    """One-time weight preparation (hoisted out of the per-call path):
    pad every feature axis to a full 128-lane tile, cast MXU operands to bf16
    and build the fused [Wa1|Wf1] / [Wa2|Wf2] weights."""
    f32, bf16 = jnp.float32, jnp.bfloat16
    S, H = params["Ws"].shape
    T = params["Wt"].shape[0]
    O = params["Wf1"].shape[1]
    Sp, Tp, Hp, Op = (_round_up(d, _LANE) for d in (S, T, H, O))

    weights = {
        "ws": _pad2d(params["Ws"], Sp, Hp).astype(bf16),
        "bs": _pad2d(params["bs"], 1, Hp).astype(f32),
        "wt": _pad2d(params["Wt"], Tp, Hp).astype(bf16),
        "bt": _pad2d(params["bt"], 1, Hp).astype(f32),
        "wsf": jnp.concatenate([_pad2d(params["Wa1"], Hp, Hp),
                                _pad2d(params["Wf1"], Hp, Op)],
                               axis=1).astype(bf16),
        "wtf": jnp.concatenate([_pad2d(params["Wa2"], Hp, Hp),
                                _pad2d(params["Wf2"], Hp, Op)],
                               axis=1).astype(bf16),
        "ba": _pad2d(params["ba"], 1, Hp).astype(f32),
        "av": _pad2d(params["av"].reshape(1, -1), 1, Hp).astype(f32),
        "bf": _pad2d(params["bf"], 1, Op).astype(f32),
        "gamma": _pad2d(params["gamma"], 1, Op).astype(f32),
        "beta": _pad2d(params["beta"], 1, Op).astype(f32),
    }
    meta = {"S": S, "T": T, "H": H, "O": O,
            "Sp": Sp, "Tp": Tp, "Hp": Hp, "Op": Op}
    return {"weights": weights, "meta": meta}


def temporal_level_attention(static_features, temporal_features, prepared, *,
                             block_batch=512):
    """Fused TemporalLevelAttention forward pass (single pallas_call).

    static_features  : [B, static_dim]   float32
    temporal_features: [B, temporal_dim] float32
    prepared         : output of prepare_params (pre-padded bf16 weights)
    """
    f32, bf16 = jnp.float32, jnp.bfloat16
    meta = prepared["meta"]
    weights = [prepared["weights"][k] for k in _WEIGHT_ORDER]
    Sp, Tp, Hp, Op, O = meta["Sp"], meta["Tp"], meta["Hp"], meta["Op"], meta["O"]

    B = static_features.shape[0]
    assert static_features.shape[1] == meta["S"]
    assert temporal_features.shape[1] == meta["T"]

    # Batch tile: multiple of 16 sublanes (bf16 vreg packing); capped so the
    # per-tile intermediates stay well inside the v7x 64 MiB VMEM budget.
    block_b = _round_up(min(block_batch, B), _SUBLANE_BF16)
    nb = -(-B // block_b)            # ceil-div; every tile has >= 1 valid row
    Bp = nb * block_b

    # Per-call work touches only the activations (weights prepared once).
    static_p = _pad2d(static_features.astype(f32), Bp, Sp).astype(bf16)
    temporal_p = _pad2d(temporal_features.astype(f32), Bp, Tp).astype(bf16)

    act_specs = [
        pl.BlockSpec((block_b, Sp), lambda p, t: (t, 0)),
        pl.BlockSpec((block_b, Tp), lambda p, t: (t, 0)),
    ]
    # Constant block index -> weights are DMA'd once and stay resident.
    weight_specs = [pl.BlockSpec(w.shape, lambda p, t: (0, 0)) for w in weights]
    # Pass 0 never writes the output; pointing all pass-0 steps at block 0
    # means the output block index only advances during pass 1 (no garbage
    # write-backs, and every block is fully written exactly once).
    out_spec = pl.BlockSpec((block_b, Op), lambda p, t: (p * t, 0))

    kernel = functools.partial(
        _temporal_attention_kernel,
        hidden_pad=Hp, out_dim_true=O, batch_true=B, block_b=block_b)

    matmul_flops = 2 * Bp * Hp * (Sp + Tp + 2 * (Hp + Op))   # per pass
    cost = pl.CostEstimate(
        flops=2 * matmul_flops,
        transcendentals=2 * Bp * Hp + 3 * Bp,
        bytes_accessed=(2 * 2 * (int(static_p.size) + int(temporal_p.size))
                        + sum(int(w.size) * w.dtype.itemsize for w in weights)
                        + Bp * Op * 4))

    out_padded = pl.pallas_call(
        kernel,
        out_shape=jax.ShapeDtypeStruct((Bp, Op), f32),
        grid_spec=pltpu.PrefetchScalarGridSpec(
            num_scalar_prefetch=0,
            grid=(2, nb),                       # (softmax pass, batch tiles)
            in_specs=act_specs + weight_specs,
            out_specs=out_spec,
            scratch_shapes=[pltpu.VMEM((1, 1), f32),    # running max  m
                            pltpu.VMEM((1, 1), f32)]),  # running sum  l
        compiler_params=pltpu.CompilerParams(
            # Both axes carry the softmax-over-batch dependency (pass order +
            # scratch-carried stats), so neither axis may be "parallel".
            dimension_semantics=("arbitrary", "arbitrary"),
            vmem_limit_bytes=32 * 1024 * 1024),
        cost_estimate=cost,
    )(static_p, temporal_p, *weights)

    return out_padded[:B, :O]


def _reference(static, temporal, p):
    """Pure-JAX f32 reference of the PyTorch forward (eval mode)."""
    h_s = static @ p["Ws"] + p["bs"]
    h_t = temporal @ p["Wt"] + p["bt"]
    a = jnp.tanh(h_s @ p["Wa1"] + h_t @ p["Wa2"] + p["ba"])
    score = a @ p["av"]
    w = jax.nn.softmax(score, axis=0)
    fused = h_s @ p["Wf1"] + (h_t * w) @ p["Wf2"] + p["bf"]
    mean = fused.mean(-1, keepdims=True)
    var = ((fused - mean) ** 2).mean(-1, keepdims=True)
    normed = (fused - mean) / jnp.sqrt(var + 1e-5) * p["gamma"] + p["beta"]
    return jnp.maximum(normed, 0.0)


def _reference_bf16(static, temporal, p):
    """Same math, with bf16 matmul operands (matches the kernel's MXU path)."""
    bf16, f32 = jnp.bfloat16, jnp.float32

    def mm(a, b):
        return jnp.dot(a.astype(bf16), b.astype(bf16), preferred_element_type=f32)

    h_s = mm(static, p["Ws"]) + p["bs"]
    h_t = mm(temporal, p["Wt"]) + p["bt"]
    a = jnp.tanh(mm(h_s, p["Wa1"]) + mm(h_t, p["Wa2"]) + p["ba"])
    score = jnp.sum(a * p["av"].reshape(1, -1), axis=-1, keepdims=True)
    w = jax.nn.softmax(score, axis=0)
    fused = mm(h_s, p["Wf1"]) + w * mm(h_t, p["Wf2"]) + p["bf"]
    mean = fused.mean(-1, keepdims=True)
    var = ((fused - mean) ** 2).mean(-1, keepdims=True)
    normed = (fused - mean) / jnp.sqrt(var + 1e-5) * p["gamma"] + p["beta"]
    return jnp.maximum(normed, 0.0)


if __name__ == "__main__":
    static_dim, temporal_dim, hidden_dim, output_dim = 16, 24, 32, 16

    key = jax.random.PRNGKey(0)
    k_s1, k_t1, k_s2, k_t2, k_params = jax.random.split(key, 5)
    params = init_params(k_params, static_dim, temporal_dim, hidden_dim, output_dim)
    prepared = prepare_params(params)            # one-time weight prep (hoisted)

    # --- test 1: small batch, single tile ---------------------------------
    B1 = 8
    static1 = jax.random.normal(k_s1, (B1, static_dim), jnp.float32)
    temporal1 = jax.random.normal(k_t1, (B1, temporal_dim), jnp.float32)
    out1 = jax.block_until_ready(
        temporal_level_attention(static1, temporal1, prepared))
    assert out1.shape == (B1, output_dim)
    assert jnp.allclose(out1, _reference_bf16(static1, temporal1, params),
                        atol=1e-2, rtol=1e-2), "mismatch vs bf16 reference (B=8)"
    assert jnp.allclose(out1, _reference(static1, temporal1, params),
                        atol=1e-1, rtol=1e-1), "mismatch vs f32 reference (B=8)"

    # --- test 2: multi-tile grid (exercises the two-pass batch softmax) ----
    B2 = 40
    static2 = jax.random.normal(k_s2, (B2, static_dim), jnp.float32)
    temporal2 = jax.random.normal(k_t2, (B2, temporal_dim), jnp.float32)
    out2 = jax.block_until_ready(
        temporal_level_attention(static2, temporal2, prepared, block_batch=16))
    assert out2.shape == (B2, output_dim)
    assert jnp.allclose(out2, _reference_bf16(static2, temporal2, params),
                        atol=1e-2, rtol=1e-2), "mismatch vs bf16 reference (B=40)"
    assert jnp.allclose(out2, _reference(static2, temporal2, params),
                        atol=1e-1, rtol=1e-1), "mismatch vs f32 reference (B=40)"

    print("KERNEL_OK")
</pallas_src>

<mosaic_0001>
module attributes {stable_mosaic.version = 11 : i64} {
  func.func @_temporal_attention_kernel(%arg0: i32, %arg1: i32, %arg2: memref<16x128xbf16, #tpu.memory_space<vmem>>, %arg3: memref<16x128xbf16, #tpu.memory_space<vmem>>, %arg4: memref<128x128xbf16, #tpu.memory_space<vmem>>, %arg5: memref<1x128xf32, #tpu.memory_space<vmem>>, %arg6: memref<128x128xbf16, #tpu.memory_space<vmem>>, %arg7: memref<1x128xf32, #tpu.memory_space<vmem>>, %arg8: memref<128x256xbf16, #tpu.memory_space<vmem>>, %arg9: memref<128x256xbf16, #tpu.memory_space<vmem>>, %arg10: memref<1x128xf32, #tpu.memory_space<vmem>>, %arg11: memref<1x128xf32, #tpu.memory_space<vmem>>, %arg12: memref<1x128xf32, #tpu.memory_space<vmem>>, %arg13: memref<1x128xf32, #tpu.memory_space<vmem>>, %arg14: memref<1x128xf32, #tpu.memory_space<vmem>>, %arg15: memref<16x128xf32, #tpu.memory_space<vmem>>, %arg16: memref<1x1xf32, #tpu.memory_space<vmem>>, %arg17: memref<1x1xf32, #tpu.memory_space<vmem>>) attributes {dimension_semantics = [#tpu.dimension_semantics<arbitrary>, #tpu.dimension_semantics<arbitrary>], iteration_bounds = array<i64: 2, 1>, scalar_prefetch = 0 : i64, scratch_operands = 2 : i64, tpu.core_type = #tpu.core_type<tc>, window_params = [{transform_indices = @transform_0, window_bounds = array<i64: 16, 128>}, {transform_indices = @transform_1, window_bounds = array<i64: 16, 128>}, {pipeline_mode = #tpu.pipeline_mode<synchronous>, transform_indices = @transform_2, window_bounds = array<i64: 128, 128>}, {pipeline_mode = #tpu.pipeline_mode<synchronous>, transform_indices = @transform_3, window_bounds = array<i64: 1, 128>}, {pipeline_mode = #tpu.pipeline_mode<synchronous>, transform_indices = @transform_4, window_bounds = array<i64: 128, 128>}, {pipeline_mode = #tpu.pipeline_mode<synchronous>, transform_indices = @transform_5, window_bounds = array<i64: 1, 128>}, {pipeline_mode = #tpu.pipeline_mode<synchronous>, transform_indices = @transform_6, window_bounds = array<i64: 128, 256>}, {pipeline_mode = #tpu.pipeline_mode<synchronous>, transform_indices = @transform_7, window_bounds = array<i64: 128, 256>}, {pipeline_mode = #tpu.pipeline_mode<synchronous>, transform_indices = @transform_8, window_bounds = array<i64: 1, 128>}, {pipeline_mode = #tpu.pipeline_mode<synchronous>, transform_indices = @transform_9, window_bounds = array<i64: 1, 128>}, {pipeline_mode = #tpu.pipeline_mode<synchronous>, transform_indices = @transform_10, window_bounds = array<i64: 1, 128>}, {pipeline_mode = #tpu.pipeline_mode<synchronous>, transform_indices = @transform_11, window_bounds = array<i64: 1, 128>}, {pipeline_mode = #tpu.pipeline_mode<synchronous>, transform_indices = @transform_12, window_bounds = array<i64: 1, 128>}, {transform_indices = @transform_13, window_bounds = array<i64: 16, 128>}]} {
    %c16_i32 = arith.constant 16 : i32
    %0 = arith.muli %arg1, %c16_i32 : i32
    %1 = tpu.iota {dimensions = array<i32: 0>} : vector<16x1xi32>
    %2 = vector.broadcast %0 : i32 to vector<16x1xi32>
    %3 = arith.addi %2, %1 : vector<16x1xi32>
    %c8_i32 = arith.constant 8 : i32
    %4 = vector.broadcast %c8_i32 : i32 to vector<16x1xi32>
    %5 = arith.cmpi slt, %3, %4 : vector<16x1xi32>
    %6 = arith.extui %5 : vector<16x1xi1> to vector<16x1xi32>
    %7 = arith.sitofp %6 : vector<16x1xi32> to vector<16x1xf32>
    %c0 = arith.constant 0 : index
    %c0_0 = arith.constant 0 : index
    %8 = vector.load %arg2[%c0, %c0_0] : memref<16x128xbf16, #tpu.memory_space<vmem>>, vector<16x128xbf16>
    %c0_1 = arith.constant 0 : index
    %c0_2 = arith.constant 0 : index
    %9 = vector.load %arg4[%c0_1, %c0_2] : memref<128x128xbf16, #tpu.memory_space<vmem>>, vector<128x128xbf16>
    %cst = arith.constant dense<0.000000e+00> : vector<16x128xf32>
    %10 = tpu.matmul %8, %9, %cst {dimension_numbers = #tpu.dot_dimension_numbers<[1], [0], [0], [1], [0, 0, 1, 1], [], []>} : vector<16x128xbf16>, vector<128x128xbf16>, vector<16x128xf32> -> vector<16x128xf32>
    %c0_3 = arith.constant 0 : index
    %c0_4 = arith.constant 0 : index
    %11 = vector.load %arg5[%c0_3, %c0_4] : memref<1x128xf32, #tpu.memory_space<vmem>>, vector<1x128xf32>
    %12 = vector.broadcast %11 : vector<1x128xf32> to vector<16x128xf32>
    %13 = arith.addf %10, %12 : vector<16x128xf32>
    %c0_5 = arith.constant 0 : index
    %c0_6 = arith.constant 0 : index
    %14 = vector.load %arg3[%c0_5, %c0_6] : memref<16x128xbf16, #tpu.memory_space<vmem>>, vector<16x128xbf16>
    %c0_7 = arith.constant 0 : index
    %c0_8 = arith.constant 0 : index
    %15 = vector.load %arg6[%c0_7, %c0_8] : memref<128x128xbf16, #tpu.memory_space<vmem>>, vector<128x128xbf16>
    %cst_9 = arith.constant dense<0.000000e+00> : vector<16x128xf32>
    %16 = tpu.matmul %14, %15, %cst_9 {dimension_numbers = #tpu.dot_dimension_numbers<[1], [0], [0], [1], [0, 0, 1, 1], [], []>} : vector<16x128xbf16>, vector<128x128xbf16>, vector<16x128xf32> -> vector<16x128xf32>
    %c0_10 = arith.constant 0 : index
    %c0_11 = arith.constant 0 : index
    %17 = vector.load %arg7[%c0_10, %c0_11] : memref<1x128xf32, #tpu.memory_space<vmem>>, vector<1x128xf32>
    %18 = vector.broadcast %17 : vector<1x128xf32> to vector<16x128xf32>
    %19 = arith.addf %16, %18 : vector<16x128xf32>
    %20 = arith.truncf %13 : vector<16x128xf32> to vector<16x128xbf16>
    %c0_12 = arith.constant 0 : index
    %c0_13 = arith.constant 0 : index
    %21 = vector.load %arg8[%c0_12, %c0_13] : memref<128x256xbf16, #tpu.memory_space<vmem>>, vector<128x256xbf16>
    %cst_14 = arith.constant dense<0.000000e+00> : vector<16x256xf32>
    %22 = tpu.matmul %20, %21, %cst_14 {dimension_numbers = #tpu.dot_dimension_numbers<[1], [0], [0], [1], [0, 0, 1, 1], [], []>} : vector<16x128xbf16>, vector<128x256xbf16>, vector<16x256xf32> -> vector<16x256xf32>
    %23 = arith.truncf %19 : vector<16x128xf32> to vector<16x128xbf16>
    %c0_15 = arith.constant 0 : index
    %c0_16 = arith.constant 0 : index
    %24 = vector.load %arg9[%c0_15, %c0_16] : memref<128x256xbf16, #tpu.memory_space<vmem>>, vector<128x256xbf16>
    %cst_17 = arith.constant dense<0.000000e+00> : vector<16x256xf32>
    %25 = tpu.matmul %23, %24, %cst_17 {dimension_numbers = #tpu.dot_dimension_numbers<[1], [0], [0], [1], [0, 0, 1, 1], [], []>} : vector<16x128xbf16>, vector<128x256xbf16>, vector<16x256xf32> -> vector<16x256xf32>
    %26 = vector.extract_strided_slice %22 {offsets = [0, 0], sizes = [16, 128], strides = [1, 1]} : vector<16x256xf32> to vector<16x128xf32>
    %27 = vector.extract_strided_slice %25 {offsets = [0, 0], sizes = [16, 128], strides = [1, 1]} : vector<16x256xf32> to vector<16x128xf32>
    %28 = arith.addf %26, %27 : vector<16x128xf32>
    %c0_18 = arith.constant 0 : index
    %c0_19 = arith.constant 0 : index
    %29 = vector.load %arg10[%c0_18, %c0_19] : memref<1x128xf32, #tpu.memory_space<vmem>>, vector<1x128xf32>
    %30 = vector.broadcast %29 : vector<1x128xf32> to vector<16x128xf32>
    %31 = arith.addf %28, %30 : vector<16x128xf32>
    %32 = math.tanh %31 : vector<16x128xf32>
    %c0_20 = arith.constant 0 : index
    %c0_21 = arith.constant 0 : index
    %33 = vector.load %arg11[%c0_20, %c0_21] : memref<1x128xf32, #tpu.memory_space<vmem>>, vector<1x128xf32>
    %34 = vector.broadcast %33 : vector<1x128xf32> to vector<16x128xf32>
    %35 = arith.mulf %32, %34 : vector<16x128xf32>
    %cst_22 = arith.constant dense<0.000000e+00> : vector<16xf32>
    %36 = vector.multi_reduction <add>, %35, %cst_22 [1] : vector<16x128xf32> to vector<16xf32>
    %37 = vector.shape_cast %36 : vector<16xf32> to vector<16x1xf32>
    %cst_23 = arith.constant -1.000000e+30 : f32
    %38 = vector.broadcast %cst_23 : f32 to vector<16x1xf32>
    %39 = arith.select %5, %37, %38 : vector<16x1xi1>, vector<16x1xf32>
    %c0_i32 = arith.constant 0 : i32
    %40 = arith.cmpi eq, %arg0, %c0_i32 : i32
    %c0_i32_24 = arith.constant 0 : i32
    %41 = arith.cmpi eq, %arg1, %c0_i32_24 : i32
    %42 = arith.andi %40, %41 : i1
    %43 = arith.extui %42 : i1 to i32
    %c0_i32_25 = arith.constant 0 : i32
    %44 = arith.cmpi ne, %43, %c0_i32_25 : i32
    scf.if %44 {
      %cst_29 = arith.constant -1.000000e+30 : f32
      %51 = vector.broadcast %cst_29 : f32 to vector<1x1xf32>
      %c0_30 = arith.constant 0 : index
      %c0_31 = arith.constant 0 : index
      %52 = vector.load %arg16[%c0_30, %c0_31] : memref<1x1xf32, #tpu.memory_space<vmem>>, vector<1x1xf32>
      tpu.vector_store %arg16[%c0_30, %c0_31], %51 {strides = array<i32>} : memref<1x1xf32, #tpu.memory_space<vmem>>, vector<1x1xf32>,
      %cst_32 = arith.constant 0.000000e+00 : f32
      %53 = vector.broadcast %cst_32 : f32 to vector<1x1xf32>
      %c0_33 = arith.constant 0 : index
      %c0_34 = arith.constant 0 : index
      %54 = vector.load %arg17[%c0_33, %c0_34] : memref<1x1xf32, #tpu.memory_space<vmem>>, vector<1x1xf32>
      tpu.vector_store %arg17[%c0_33, %c0_34], %53 {strides = array<i32>} : memref<1x1xf32, #tpu.memory_space<vmem>>, vector<1x1xf32>,
    } else {
    }
    %c0_i32_26 = arith.constant 0 : i32
    %45 = arith.cmpi eq, %arg0, %c0_i32_26 : i32
    %46 = arith.extui %45 : i1 to i32
    %c0_i32_27 = arith.constant 0 : i32
    %47 = arith.cmpi ne, %46, %c0_i32_27 : i32
    scf.if %47 {
      %cst_29 = arith.constant dense<0xFF800000> : vector<1xf32>
      %51 = vector.multi_reduction <maximumf>, %39, %cst_29 [0] : vector<16x1xf32> to vector<1xf32>
      %52 = vector.shape_cast %51 : vector<1xf32> to vector<1x1xf32>
      %c0_30 = arith.constant 0 : index
      %c0_31 = arith.constant 0 : index
      %53 = vector.load %arg16[%c0_30, %c0_31] : memref<1x1xf32, #tpu.memory_space<vmem>>, vector<1x1xf32>
      %54 = arith.maximumf %53, %52 : vector<1x1xf32>
      %c0_32 = arith.constant 0 : index
      %c0_33 = arith.constant 0 : index
      %55 = vector.load %arg17[%c0_32, %c0_33] : memref<1x1xf32, #tpu.memory_space<vmem>>, vector<1x1xf32>
      %56 = arith.subf %53, %54 : vector<1x1xf32>
      %57 = math.exp %56 : vector<1x1xf32>
      %58 = arith.mulf %55, %57 : vector<1x1xf32>
      %59 = vector.broadcast %54 : vector<1x1xf32> to vector<16x1xf32>
      %60 = arith.subf %39, %59 : vector<16x1xf32>
      %61 = math.exp %60 : vector<16x1xf32>
      %62 = arith.mulf %61, %7 : vector<16x1xf32>
      %cst_34 = arith.constant dense<0.000000e+00> : vector<1xf32>
      %63 = vector.multi_reduction <add>, %62, %cst_34 [0] : vector<16x1xf32> to vector<1xf32>
      %64 = vector.shape_cast %63 : vector<1xf32> to vector<1x1xf32>
      %65 = arith.addf %58, %64 : vector<1x1xf32>
      %c0_35 = arith.constant 0 : index
      %c0_36 = arith.constant 0 : index
      %66 = vector.load %arg17[%c0_35, %c0_36] : memref<1x1xf32, #tpu.memory_space<vmem>>, vector<1x1xf32>
      tpu.vector_store %arg17[%c0_35, %c0_36], %65 {strides = array<i32>} : memref<1x1xf32, #tpu.memory_space<vmem>>, vector<1x1xf32>,
      %c0_37 = arith.constant 0 : index
      %c0_38 = arith.constant 0 : index
      %67 = vector.load %arg16[%c0_37, %c0_38] : memref<1x1xf32, #tpu.memory_space<vmem>>, vector<1x1xf32>
      tpu.vector_store %arg16[%c0_37, %c0_38], %54 {strides = array<i32>} : memref<1x1xf32, #tpu.memory_space<vmem>>, vector<1x1xf32>,
    } else {
    }
    %c1_i32 = arith.constant 1 : i32
    %48 = arith.cmpi eq, %arg0, %c1_i32 : i32
    %49 = arith.extui %48 : i1 to i32
    %c0_i32_28 = arith.constant 0 : i32
    %50 = arith.cmpi ne, %49, %c0_i32_28 : i32
    scf.if %50 {
      %c0_29 = arith.constant 0 : index
      %c0_30 = arith.constant 0 : index
      %51 = vector.load %arg16[%c0_29, %c0_30] : memref<1x1xf32, #tpu.memory_space<vmem>>, vector<1x1xf32>
      %52 = vector.broadcast %51 : vector<1x1xf32> to vector<16x1xf32>
      %53 = arith.subf %39, %52 : vector<16x1xf32>
      %54 = math.exp %53 : vector<16x1xf32>
      %c0_31 = arith.constant 0 : index
      %c0_32 = arith.constant 0 : index
      %55 = vector.load %arg17[%c0_31, %c0_32] : memref<1x1xf32, #tpu.memory_space<vmem>>, vector<1x1xf32>
      %56 = vector.broadcast %55 : vector<1x1xf32> to vector<16x1xf32>
      %57 = arith.divf %54, %56 : vector<16x1xf32>
      %58 = arith.mulf %57, %7 : vector<16x1xf32>
      %59 = vector.extract_strided_slice %22 {offsets = [0, 128], sizes = [16, 128], strides = [1, 1]} : vector<16x256xf32> to vector<16x128xf32>
      %60 = vector.extract_strided_slice %25 {offsets = [0, 128], sizes = [16, 128], strides = [1, 1]} : vector<16x256xf32> to vector<16x128xf32>
      %61 = vector.broadcast %58 : vector<16x1xf32> to vector<16x128xf32>
      %62 = arith.mulf %61, %60 : vector<16x128xf32>
      %63 = arith.addf %59, %62 : vector<16x128xf32>
      %c0_33 = arith.constant 0 : index
      %c0_34 = arith.constant 0 : index
      %64 = vector.load %arg12[%c0_33, %c0_34] : memref<1x128xf32, #tpu.memory_space<vmem>>, vector<1x128xf32>
      %65 = vector.broadcast %64 : vector<1x128xf32> to vector<16x128xf32>
      %66 = arith.addf %63, %65 : vector<16x128xf32>
      %67 = tpu.iota {dimensions = array<i32: 1>} : vector<1x128xi32>
      %c16_i32_35 = arith.constant 16 : i32
      %68 = vector.broadcast %c16_i32_35 : i32 to vector<1x128xi32>
      %69 = arith.cmpi slt, %67, %68 : vector<1x128xi32>
      %70 = arith.extui %69 : vector<1x128xi1> to vector<1x128xi32>
      %71 = arith.sitofp %70 : vector<1x128xi32> to vector<1x128xf32>
      %cst_36 = arith.constant dense<0.000000e+00> : vector<16xf32>
      %72 = vector.multi_reduction <add>, %66, %cst_36 [1] : vector<16x128xf32> to vector<16xf32>
      %73 = vector.shape_cast %72 : vector<16xf32> to vector<16x1xf32>
      %cst_37 = arith.constant 6.250000e-02 : f32
      %74 = vector.broadcast %cst_37 : f32 to vector<16x1xf32>
      %75 = arith.mulf %73, %74 : vector<16x1xf32>
      %76 = vector.broadcast %75 : vector<16x1xf32> to vector<16x128xf32>
      %77 = arith.subf %66, %76 : vector<16x128xf32>
      %78 = vector.broadcast %71 : vector<1x128xf32> to vector<16x128xf32>
      %79 = arith.mulf %77, %78 : vector<16x128xf32>
      %80 = arith.mulf %79, %79 : vector<16x128xf32>
      %cst_38 = arith.constant dense<0.000000e+00> : vector<16xf32>
      %81 = vector.multi_reduction <add>, %80, %cst_38 [1] : vector<16x128xf32> to vector<16xf32>
      %82 = vector.shape_cast %81 : vector<16xf32> to vector<16x1xf32>
      %cst_39 = arith.constant 6.250000e-02 : f32
      %83 = vector.broadcast %cst_39 : f32 to vector<16x1xf32>
      %84 = arith.mulf %82, %83 : vector<16x1xf32>
      %cst_40 = arith.constant 9.99999974E-6 : f32
      %85 = vector.broadcast %cst_40 : f32 to vector<16x1xf32>
      %86 = arith.addf %84, %85 : vector<16x1xf32>
      %87 = math.rsqrt %86 : vector<16x1xf32>
      %88 = vector.broadcast %87 : vector<16x1xf32> to vector<16x128xf32>
      %89 = arith.mulf %79, %88 : vector<16x128xf32>
      %c0_41 = arith.constant 0 : index
      %c0_42 = arith.constant 0 : index
      %90 = vector.load %arg13[%c0_41, %c0_42] : memref<1x128xf32, #tpu.memory_space<vmem>>, vector<1x128xf32>
      %91 = vector.broadcast %90 : vector<1x128xf32> to vector<16x128xf32>
      %92 = arith.mulf %89, %91 : vector<16x128xf32>
      %c0_43 = arith.constant 0 : index
      %c0_44 = arith.constant 0 : index
      %93 = vector.load %arg14[%c0_43, %c0_44] : memref<1x128xf32, #tpu.memory_space<vmem>>, vector<1x128xf32>
      %94 = vector.broadcast %93 : vector<1x128xf32> to vector<16x128xf32>
      %95 = arith.addf %92, %94 : vector<16x128xf32>
      %cst_45 = arith.constant 0.000000e+00 : f32
      %96 = vector.broadcast %cst_45 : f32 to vector<16x128xf32>
      %97 = arith.maximumf %95, %96 : vector<16x128xf32>
      %c0_46 = arith.constant 0 : index
      %c0_47 = arith.constant 0 : index
      %98 = vector.load %arg15[%c0_46, %c0_47] : memref<16x128xf32, #tpu.memory_space<vmem>>, vector<16x128xf32>
      tpu.vector_store %arg15[%c0_46, %c0_47], %97 {strides = array<i32>} : memref<16x128xf32, #tpu.memory_space<vmem>>, vector<16x128xf32>,
    } else {
    }
    return
  }
  func.func @transform_0(%arg0: i32, %arg1: i32) -> (i32, i32) {
    %c0_i32 = arith.constant 0 : i32
    %c0_i32_0 = arith.constant 0 : i32
    return %arg1, %c0_i32 : i32, i32
  }
  func.func @transform_1(%arg0: i32, %arg1: i32) -> (i32, i32) {
    %c0_i32 = arith.constant 0 : i32
    %c0_i32_0 = arith.constant 0 : i32
    return %arg1, %c0_i32 : i32, i32
  }
  func.func @transform_2(%arg0: i32, %arg1: i32) -> (i32, i32) {
    %c0_i32 = arith.constant 0 : i32
    %c0_i32_0 = arith.constant 0 : i32
    %c0_i32_1 = arith.constant 0 : i32
    return %c0_i32, %c0_i32_0 : i32, i32
  }
  func.func @transform_3(%arg0: i32, %arg1: i32) -> (i32, i32) {
    %c0_i32 = arith.constant 0 : i32
    %c0_i32_0 = arith.constant 0 : i32
    %c0_i32_1 = arith.constant 0 : i32
    return %c0_i32, %c0_i32_0 : i32, i32
  }
  func.func @transform_4(%arg0: i32, %arg1: i32) -> (i32, i32) {
    %c0_i32 = arith.constant 0 : i32
    %c0_i32_0 = arith.constant 0 : i32
    %c0_i32_1 = arith.constant 0 : i32
    return %c0_i32, %c0_i32_0 : i32, i32
  }
  func.func @transform_5(%arg0: i32, %arg1: i32) -> (i32, i32) {
    %c0_i32 = arith.constant 0 : i32
    %c0_i32_0 = arith.constant 0 : i32
    %c0_i32_1 = arith.constant 0 : i32
    return %c0_i32, %c0_i32_0 : i32, i32
  }
  func.func @transform_6(%arg0: i32, %arg1: i32) -> (i32, i32) {
    %c0_i32 = arith.constant 0 : i32
    %c0_i32_0 = arith.constant 0 : i32
    %c0_i32_1 = arith.constant 0 : i32
    return %c0_i32, %c0_i32_0 : i32, i32
  }
  func.func @transform_7(%arg0: i32, %arg1: i32) -> (i32, i32) {
    %c0_i32 = arith.constant 0 : i32
    %c0_i32_0 = arith.constant 0 : i32
    %c0_i32_1 = arith.constant 0 : i32
    return %c0_i32, %c0_i32_0 : i32, i32
  }
  func.func @transform_8(%arg0: i32, %arg1: i32) -> (i32, i32) {
    %c0_i32 = arith.constant 0 : i32
    %c0_i32_0 = arith.constant 0 : i32
    %c0_i32_1 = arith.constant 0 : i32
    return %c0_i32, %c0_i32_0 : i32, i32
  }
  func.func @transform_9(%arg0: i32, %arg1: i32) -> (i32, i32) {
    %c0_i32 = arith.constant 0 : i32
    %c0_i32_0 = arith.constant 0 : i32
    %c0_i32_1 = arith.constant 0 : i32
    return %c0_i32, %c0_i32_0 : i32, i32
  }
  func.func @transform_10(%arg0: i32, %arg1: i32) -> (i32, i32) {
    %c0_i32 = arith.constant 0 : i32
    %c0_i32_0 = arith.constant 0 : i32
    %c0_i32_1 = arith.constant 0 : i32
    return %c0_i32, %c0_i32_0 : i32, i32
  }
  func.func @transform_11(%arg0: i32, %arg1: i32) -> (i32, i32) {
    %c0_i32 = arith.constant 0 : i32
    %c0_i32_0 = arith.constant 0 : i32
    %c0_i32_1 = arith.constant 0 : i32
    return %c0_i32, %c0_i32_0 : i32, i32
  }
  func.func @transform_12(%arg0: i32, %arg1: i32) -> (i32, i32) {
    %c0_i32 = arith.constant 0 : i32
    %c0_i32_0 = arith.constant 0 : i32
    %c0_i32_1 = arith.constant 0 : i32
    return %c0_i32, %c0_i32_0 : i32, i32
  }
  func.func @transform_13(%arg0: i32, %arg1: i32) -> (i32, i32) {
    %0 = arith.muli %arg0, %arg1 : i32
    %c0_i32 = arith.constant 0 : i32
    %c0_i32_0 = arith.constant 0 : i32
    return %0, %c0_i32 : i32, i32
  }
}

</mosaic_0001>

<llo_original>
// kernel: tpu_custom_call.1
$region0: #{tpu_custom_call.1}
  #allocation0 [shape = 'u32[]', space=smem, size = 0x4, offset = 0x4, fixed_abs, tag = 'smem constant byte address 0x4 - core index']
  #allocation1 [shape = 'u32[144,128]{1,0:T(1,128)}', space=vmem, size = 0x12000, scoped, tag = 'internal scratch']
  #allocation2 [shape = 'f32[1,1]{1,0:T(1,128)}', space=vmem, size = 0x200, scoped, tag = 'scratch operand']
  #allocation3 [shape = 'f32[1,1]{1,0:T(1,128)}', space=vmem, size = 0x200, scoped, tag = 'scratch operand']
  %s0 = inlined_call_operand.hbm [shape: bf16[16,128], index: 0, kind: input, shape index: {}]
  %s1 = inlined_call_operand.hbm [shape: bf16[16,128], index: 1, kind: input, shape index: {}]
  %s2 = inlined_call_operand.hbm [shape: bf16[128,128], index: 2, kind: input, shape index: {}]
  %s3 = inlined_call_operand.vmem [shape: f32[1,128], index: 3, kind: input, shape index: {}]
  %s4 = inlined_call_operand.hbm [shape: bf16[128,128], index: 4, kind: input, shape index: {}]
  %s5 = inlined_call_operand.vmem [shape: f32[1,128], index: 5, kind: input, shape index: {}]
  %s6 = inlined_call_operand.hbm [shape: bf16[128,256], index: 6, kind: input, shape index: {}]
  %s7 = inlined_call_operand.hbm [shape: bf16[128,256], index: 7, kind: input, shape index: {}]
  %s8 = inlined_call_operand.vmem [shape: f32[1,128], index: 8, kind: input, shape index: {}]
  %s9 = inlined_call_operand.vmem [shape: f32[1,128], index: 9, kind: input, shape index: {}]
  %s10 = inlined_call_operand.vmem [shape: f32[1,128], index: 10, kind: input, shape index: {}]
  %s11 = inlined_call_operand.vmem [shape: f32[1,128], index: 11, kind: input, shape index: {}]
  %s12 = inlined_call_operand.vmem [shape: f32[1,128], index: 12, kind: input, shape index: {}]
  %s13 = inlined_call_operand.hbm [shape: f32[16,128], index: 13, kind: output, shape index: {}]
  %s14 = sld [smem:[#allocation0]]
  $region121: #{tpu_custom_call.1} parent=0
    _
  %s16 = ssub.s32 1, %s14
  %s17 = scalar_select 0, %s16, %s14
  $region1: #{tpu_custom_call.1} parent=0
    #allocation4 [shape = 'u8[4096]{0}', space=vmem, size = 0x1000, scoped, tag = 'input window, operand 0, single buffered']
    #allocation5 [shape = 's32[2]{0}', space=sflag, size = 0x8, scoped, tag = 'scoped memory for tpu_custom_call.1']
    #allocation6 [shape = 's32[2]{0}', space=sflag, size = 0x8, scoped, tag = 'scoped memory for tpu_custom_call.1']
    #allocation7 [shape = 'u8[4096]{0}', space=vmem, size = 0x1000, scoped, tag = 'input window, operand 1, single buffered']
    #allocation8 [shape = 's32[1]{0}', space=sflag, size = 0x4, scoped, tag = 'scoped memory for tpu_custom_call.1']
    #allocation9 [shape = 'u8[32768]{0}', space=vmem, size = 0x8000, scoped, tag = 'input window, operand 2, single buffered']
    #allocation10 [shape = 'u8[32768]{0}', space=vmem, size = 0x8000, scoped, tag = 'input window, operand 4, single buffered']
    #allocation11 [shape = 's32[1]{0}', space=sflag, size = 0x4, scoped, tag = 'scoped memory for tpu_custom_call.1']
    #allocation12 [shape = 'u8[65536]{0}', space=vmem, size = 0x10000, scoped, tag = 'input window, operand 6, single buffered']
    #allocation13 [shape = 'u8[65536]{0}', space=vmem, size = 0x10000, scoped, tag = 'input window, operand 7, single buffered']
    #allocation14 [shape = 's32[1]{0}', space=sflag, size = 0x4, scoped, tag = 'scoped memory for tpu_custom_call.1']
    #allocation15 [shape = 'u8[16384]{0}', space=vmem, size = 0x4000, scoped, tag = 'output window, operand 0']
    %18 = vsyncpa [#allocation5], 0
    %19 = vsyncpa [#allocation8], 0
    %20 = vsyncpa [#allocation11], 0
    %21 = vsyncpa [#allocation14], 0
    %22 = vsyncpa [#allocation6], 0
    %s23 = scalar_lea.sflag [#allocation6], 1
    %24 = vsyncpa %s23, 0
    loop: start=0, step=1, limit=4
    $region2: #{tpu_custom_call.1} parent=1 // loop_pre_header
      _
    $region3: #{tpu_custom_call.1} parent=1 // loop_header
      %s26 = sphi 0, %s30
      %p27 = scmp.ge.s32.totalorder %s26, 4
      %s33 = sphi 0, %s45
      %s34 = sphi 0, %s41
      %s35 = sphi 0, %s33
      %s36 = sphi 0, %s34
      %s37 = sphi 0, %s35
      %s38 = sphi 0, %s36
      %s48 = sphi 0, %s50
      %s51 = sphi 0, %s48
      %s52 = sphi 0, %s51
      %s68 = sphi 0, %s52
      %s74 = sphi 0, %s76
      %s77 = sphi 0, %s74
      %s78 = sphi 0, %s77
      %s94 = sphi 0, %s78
      %s98 = sphi 0, %s98
      %s100 = sphi 0, %s98
      %s101 = sphi 0, %s100
      %s115 = sphi 0, %s101
      %s119 = sphi 0, %s119
      %s121 = sphi 0, %s119
      %s122 = sphi 0, %s121
      %s136 = sphi 0, %s122
      %s140 = sphi 0, %s140
      %s142 = sphi 0, %s140
      %s143 = sphi 0, %s142
      %s157 = sphi 0, %s143
      %s161 = sphi 0, %s161
      %s163 = sphi 0, %s161
      %s164 = sphi 0, %s163
      %s178 = sphi 0, %s164
      %s182 = sphi 0, %s182
      %s184 = sphi 0, %s182
      %s185 = sphi 0, %s184
      %s199 = sphi 0, %s185
      %s203 = sphi 0, %s203
      %s205 = sphi 0, %s203
      %s206 = sphi 0, %s205
      %s220 = sphi 0, %s206
      %s224 = sphi 0, %s224
      %s226 = sphi 0, %s224
      %s227 = sphi 0, %s226
      %s241 = sphi 0, %s227
      %s245 = sphi 0, %s245
      %s247 = sphi 0, %s245
      %s248 = sphi 0, %s247
      %s262 = sphi 0, %s248
      %s266 = sphi 0, %s266
      %s268 = sphi 0, %s266
      %s269 = sphi 0, %s268
      %s283 = sphi 0, %s269
      %s287 = sphi 0, %s287
      %s289 = sphi 0, %s287
      %s290 = sphi 0, %s289
      %s304 = sphi 0, %s290
      %s308 = sphi 0, %s308
      %s310 = sphi 0, %s308
      %s311 = sphi 0, %s310
      %s325 = sphi 0, %s311
      %s333 = sphi 0, %s335
      %s336 = sphi 0, %s333
      %s337 = sphi 0, %s336
      %s353 = sphi 0, %s337
    $region4: #{tpu_custom_call.1} parent=1 // loop_header_branch
      %29 = sbr.rel (%p27) target = $region8
    $region5: #{tpu_custom_call.1} parent=1 // loop_body
      %s31 = ssub.s32 %s26, 1
      %s32 = ssub.s32 %s26, 2
      %s39 = sadd.s32 1, %s34
      %p40 = scmp.ge.s32.totalorder %s39, 1
      %s41 = scalar_select %p40, 0, %s39
      %s42 = sadd.s32 1, %s33
      %s43 = scalar_select %p40, %s42, %s33
      %p44 = scmp.ge.s32.totalorder %s43, 2
      %s45 = scalar_select %p44, 0, %s43
      %s46 = ssub.s32 %s34, %s41
      %p47 = scmp.eq.s32.totalorder %s46, 0
      %s49 = sadd.s32 %s48, 1
      %s50 = scalar_select %p47, %s48, %s49
      %p53 = pneg %p47
      %p54 = scmp.eq.s32.totalorder %s26, 1
      %p55 = por %p53, %p54
      %p56 = scmp.ne.s32.totalorder %s48, %s51
      %p57 = scmp.eq.s32.totalorder %s26, 0
      %p58 = por %p56, %p57
      %p59 = scmp.ne.s32.totalorder %s48, %s51
      %p60 = scmp.eq.s32.totalorder %s31, 1
      %p61 = por %p59, %p60
      %p62 = scmp.ne.s32.totalorder %s51, %s52
      %p63 = scmp.eq.s32.totalorder %s31, 0
      %p64 = por %p62, %p63
      %p65 = scmp.ne.s32.totalorder %s51, %s52
      %p66 = scmp.eq.s32.totalorder %s32, 1
      %p67 = por %p65, %p66
      %p69 = scmp.ne.s32.totalorder %s52, %s68
      %p70 = scmp.eq.s32.totalorder %s32, 0
      %p71 = por %p69, %p70
      %s72 = ssub.s32 %s34, %s41
      %p73 = scmp.eq.s32.totalorder %s72, 0
      %s75 = sadd.s32 %s74, 1
      %s76 = scalar_select %p73, %s74, %s75
      %p79 = pneg %p73
      %p80 = scmp.eq.s32.totalorder %s26, 1
      %p81 = por %p79, %p80
      %p82 = scmp.ne.s32.totalorder %s74, %s77
      %p83 = scmp.eq.s32.totalorder %s26, 0
      %p84 = por %p82, %p83
      %p85 = scmp.ne.s32.totalorder %s74, %s77
      %p86 = scmp.eq.s32.totalorder %s31, 1
      %p87 = por %p85, %p86
      %p88 = scmp.ne.s32.totalorder %s77, %s78
      %p89 = scmp.eq.s32.totalorder %s31, 0
      %p90 = por %p88, %p89
      %p91 = scmp.ne.s32.totalorder %s77, %s78
      %p92 = scmp.eq.s32.totalorder %s32, 1
      %p93 = por %p91, %p92
      %p95 = scmp.ne.s32.totalorder %s78, %s94
      %p96 = scmp.eq.s32.totalorder %s32, 0
      %p97 = por %p95, %p96
      %s99 = sadd.s32 %s98, 1
      %p102 = scmp.eq.s32.totalorder %s26, 1
      %p103 = scmp.ne.s32.totalorder %s98, %s100
      %p104 = scmp.eq.s32.totalorder %s26, 0
      %p105 = por %p103, %p104
      %p106 = scmp.ne.s32.totalorder %s98, %s100
      %p107 = scmp.eq.s32.totalorder %s31, 1
      %p108 = por %p106, %p107
      %p109 = scmp.ne.s32.totalorder %s100, %s101
      %p110 = scmp.eq.s32.totalorder %s31, 0
      %p111 = por %p109, %p110
      %p112 = scmp.ne.s32.totalorder %s100, %s101
      %p113 = scmp.eq.s32.totalorder %s32, 1
      %p114 = por %p112, %p113
      %p116 = scmp.ne.s32.totalorder %s101, %s115
      %p117 = scmp.eq.s32.totalorder %s32, 0
      %p118 = por %p116, %p117
      %s120 = sadd.s32 %s119, 1
      %p123 = scmp.eq.s32.totalorder %s26, 1
      %p124 = scmp.ne.s32.totalorder %s119, %s121
      %p125 = scmp.eq.s32.totalorder %s26, 0
      %p126 = por %p124, %p125
      %p127 = scmp.ne.s32.totalorder %s119, %s121
      %p128 = scmp.eq.s32.totalorder %s31, 1
      %p129 = por %p127, %p128
      %p130 = scmp.ne.s32.totalorder %s121, %s122
      %p131 = scmp.eq.s32.totalorder %s31, 0
      %p132 = por %p130, %p131
      %p133 = scmp.ne.s32.totalorder %s121, %s122
      %p134 = scmp.eq.s32.totalorder %s32, 1
      %p135 = por %p133, %p134
      %p137 = scmp.ne.s32.totalorder %s122, %s136
      %p138 = scmp.eq.s32.totalorder %s32, 0
      %p139 = por %p137, %p138
      %s141 = sadd.s32 %s140, 1
      %p144 = scmp.eq.s32.totalorder %s26, 1
      %p145 = scmp.ne.s32.totalorder %s140, %s142
      %p146 = scmp.eq.s32.totalorder %s26, 0
      %p147 = por %p145, %p146
      %p148 = scmp.ne.s32.totalorder %s140, %s142
      %p149 = scmp.eq.s32.totalorder %s31, 1
      %p150 = por %p148, %p149
      %p151 = scmp.ne.s32.totalorder %s142, %s143
      %p152 = scmp.eq.s32.totalorder %s31, 0
      %p153 = por %p151, %p152
      %p154 = scmp.ne.s32.totalorder %s142, %s143
      %p155 = scmp.eq.s32.totalorder %s32, 1
      %p156 = por %p154, %p155
      %p158 = scmp.ne.s32.totalorder %s143, %s157
      %p159 = scmp.eq.s32.totalorder %s32, 0
      %p160 = por %p158, %p159
      %s162 = sadd.s32 %s161, 1
      %p165 = scmp.eq.s32.totalorder %s26, 1
      %p166 = scmp.ne.s32.totalorder %s161, %s163
      %p167 = scmp.eq.s32.totalorder %s26, 0
      %p168 = por %p166, %p167
      %p169 = scmp.ne.s32.totalorder %s161, %s163
      %p170 = scmp.eq.s32.totalorder %s31, 1
      %p171 = por %p169, %p170
      %p172 = scmp.ne.s32.totalorder %s163, %s164
      %p173 = scmp.eq.s32.totalorder %s31, 0
      %p174 = por %p172, %p173
      %p175 = scmp.ne.s32.totalorder %s163, %s164
      %p176 = scmp.eq.s32.totalorder %s32, 1
      %p177 = por %p175, %p176
      %p179 = scmp.ne.s32.totalorder %s164, %s178
      %p180 = scmp.eq.s32.totalorder %s32, 0
      %p181 = por %p179, %p180
      %s183 = sadd.s32 %s182, 1
      %p186 = scmp.eq.s32.totalorder %s26, 1
      %p187 = scmp.ne.s32.totalorder %s182, %s184
      %p188 = scmp.eq.s32.totalorder %s26, 0
      %p189 = por %p187, %p188
      %p190 = scmp.ne.s32.totalorder %s182, %s184
      %p191 = scmp.eq.s32.totalorder %s31, 1
      %p192 = por %p190, %p191
      %p193 = scmp.ne.s32.totalorder %s184, %s185
      %p194 = scmp.eq.s32.totalorder %s31, 0
      %p195 = por %p193, %p194
      %p196 = scmp.ne.s32.totalorder %s184, %s185
      %p197 = scmp.eq.s32.totalorder %s32, 1
      %p198 = por %p196, %p197
      %p200 = scmp.ne.s32.totalorder %s185, %s199
      %p201 = scmp.eq.s32.totalorder %s32, 0
      %p202 = por %p200, %p201
      %s204 = sadd.s32 %s203, 1
      %p207 = scmp.eq.s32.totalorder %s26, 1
      %p208 = scmp.ne.s32.totalorder %s203, %s205
      %p209 = scmp.eq.s32.totalorder %s26, 0
      %p210 = por %p208, %p209
      %p211 = scmp.ne.s32.totalorder %s203, %s205
      %p212 = scmp.eq.s32.totalorder %s31, 1
      %p213 = por %p211, %p212
      %p214 = scmp.ne.s32.totalorder %s205, %s206
      %p215 = scmp.eq.s32.totalorder %s31, 0
      %p216 = por %p214, %p215
      %p217 = scmp.ne.s32.totalorder %s205, %s206
      %p218 = scmp.eq.s32.totalorder %s32, 1
      %p219 = por %p217, %p218
      %p221 = scmp.ne.s32.totalorder %s206, %s220
      %p222 = scmp.eq.s32.totalorder %s32, 0
      %p223 = por %p221, %p222
      %s225 = sadd.s32 %s224, 1
      %p228 = scmp.eq.s32.totalorder %s26, 1
      %p229 = scmp.ne.s32.totalorder %s224, %s226
      %p230 = scmp.eq.s32.totalorder %s26, 0
      %p231 = por %p229, %p230
      %p232 = scmp.ne.s32.totalorder %s224, %s226
      %p233 = scmp.eq.s32.totalorder %s31, 1
      %p234 = por %p232, %p233
      %p235 = scmp.ne.s32.totalorder %s226, %s227
      %p236 = scmp.eq.s32.totalorder %s31, 0
      %p237 = por %p235, %p236
      %p238 = scmp.ne.s32.totalorder %s226, %s227
      %p239 = scmp.eq.s32.totalorder %s32, 1
      %p240 = por %p238, %p239
      %p242 = scmp.ne.s32.totalorder %s227, %s241
      %p243 = scmp.eq.s32.totalorder %s32, 0
      %p244 = por %p242, %p243
      %s246 = sadd.s32 %s245, 1
      %p249 = scmp.eq.s32.totalorder %s26, 1
      %p250 = scmp.ne.s32.totalorder %s245, %s247
      %p251 = scmp.eq.s32.totalorder %s26, 0
      %p252 = por %p250, %p251
      %p253 = scmp.ne.s32.totalorder %s245, %s247
      %p254 = scmp.eq.s32.totalorder %s31, 1
      %p255 = por %p253, %p254
      %p256 = scmp.ne.s32.totalorder %s247, %s248
      %p257 = scmp.eq.s32.totalorder %s31, 0
      %p258 = por %p256, %p257
      %p259 = scmp.ne.s32.totalorder %s247, %s248
      %p260 = scmp.eq.s32.totalorder %s32, 1
      %p261 = por %p259, %p260
      %p263 = scmp.ne.s32.totalorder %s248, %s262
      %p264 = scmp.eq.s32.totalorder %s32, 0
      %p265 = por %p263, %p264
      %s267 = sadd.s32 %s266, 1
      %p270 = scmp.eq.s32.totalorder %s26, 1
      %p271 = scmp.ne.s32.totalorder %s266, %s268
      %p272 = scmp.eq.s32.totalorder %s26, 0
      %p273 = por %p271, %p272
      %p274 = scmp.ne.s32.totalorder %s266, %s268
      %p275 = scmp.eq.s32.totalorder %s31, 1
      %p276 = por %p274, %p275
      %p277 = scmp.ne.s32.totalorder %s268, %s269
      %p278 = scmp.eq.s32.totalorder %s31, 0
      %p279 = por %p277, %p278
      %p280 = scmp.ne.s32.totalorder %s268, %s269
      %p281 = scmp.eq.s32.totalorder %s32, 1
      %p282 = por %p280, %p281
      %p284 = scmp.ne.s32.totalorder %s269, %s283
      %p285 = scmp.eq.s32.totalorder %s32, 0
      %p286 = por %p284, %p285
      %s288 = sadd.s32 %s287, 1
      %p291 = scmp.eq.s32.totalorder %s26, 1
      %p292 = scmp.ne.s32.totalorder %s287, %s289
      %p293 = scmp.eq.s32.totalorder %s26, 0
      %p294 = por %p292, %p293
      %p295 = scmp.ne.s32.totalorder %s287, %s289
      %p296 = scmp.eq.s32.totalorder %s31, 1
      %p297 = por %p295, %p296
      %p298 = scmp.ne.s32.totalorder %s289, %s290
      %p299 = scmp.eq.s32.totalorder %s31, 0
      %p300 = por %p298, %p299
      %p301 = scmp.ne.s32.totalorder %s289, %s290
      %p302 = scmp.eq.s32.totalorder %s32, 1
      %p303 = por %p301, %p302
      %p305 = scmp.ne.s32.totalorder %s290, %s304
      %p306 = scmp.eq.s32.totalorder %s32, 0
      %p307 = por %p305, %p306
      %s309 = sadd.s32 %s308, 1
      %p312 = scmp.eq.s32.totalorder %s26, 1
      %p313 = scmp.ne.s32.totalorder %s308, %s310
      %p314 = scmp.eq.s32.totalorder %s26, 0
      %p315 = por %p313, %p314
      %p316 = scmp.ne.s32.totalorder %s308, %s310
      %p317 = scmp.eq.s32.totalorder %s31, 1
      %p318 = por %p316, %p317
      %p319 = scmp.ne.s32.totalorder %s310, %s311
      %p320 = scmp.eq.s32.totalorder %s31, 0
      %p321 = por %p319, %p320
      %p322 = scmp.ne.s32.totalorder %s310, %s311
      %p323 = scmp.eq.s32.totalorder %s32, 1
      %p324 = por %p322, %p323
      %p326 = scmp.ne.s32.totalorder %s311, %s325
      %p327 = scmp.eq.s32.totalorder %s32, 0
      %p328 = por %p326, %p327
      %s329 = smul.u32 %s33, %s34
      %s330 = smul.u32 %s45, %s41
      %s331 = ssub.s32 %s329, %s330
      %p332 = scmp.eq.s32.totalorder %s331, 0
      %s334 = sadd.s32 %s333, 1
      %s335 = scalar_select %p332, %s333, %s334
      %p338 = pneg %p332
      %p339 = scmp.eq.s32.totalorder %s26, 1
      %p340 = por %p338, %p339
      %p341 = scmp.ne.s32.totalorder %s333, %s336
      %p342 = scmp.eq.s32.totalorder %s26, 0
      %p343 = por %p341, %p342
      %p344 = scmp.ne.s32.totalorder %s333, %s336
      %p345 = scmp.eq.s32.totalorder %s31, 1
      %p346 = por %p344, %p345
      %p347 = scmp.ne.s32.totalorder %s336, %s337
      %p348 = scmp.eq.s32.totalorder %s31, 0
      %p349 = por %p347, %p348
      %p350 = scmp.ne.s32.totalorder %s336, %s337
      %p351 = scmp.eq.s32.totalorder %s32, 1
      %p352 = por %p350, %p351
      %p354 = scmp.ne.s32.totalorder %s337, %s353
      %p355 = scmp.eq.s32.totalorder %s32, 0
      %p356 = por %p354, %p355
      %p357 = scmp.le.s32.totalorder 1, %s26
      %p358 = scmp.lt.s32.totalorder %s26, 3
      %p359 = pnand %p357, %p358
      %p360 = pneg %p359
      // Predicated region
      $region9: #{tpu_custom_call.1} parent=5 // pred_check
        _
      $region10: #{tpu_custom_call.1} parent=5 // pred_check_branch
        %362 = sbr.rel (%p359) target = $region12
      $region11: #{tpu_custom_call.1} parent=5 // pred_region
        %s363 = ssub.s32 %s26, 1
        // Predicated region
        $region13: #{tpu_custom_call.1} parent=11 // pred_check
          %p364 = pneg %p64
        $region14: #{tpu_custom_call.1} parent=11 // pred_check_branch
          %366 = sbr.rel (%p364) target = $region16
        $region15: #{tpu_custom_call.1} parent=11 // pred_region
          %s367 = smul.u32 2, %s36
          %s369 = ssub.s32 128, 128
          %370 = vsyncadd [#allocation5], %s369
          %s371 = smul.addr %s367, 64
          %s372 = scalar_lea.hbm %s0, %s371
          %s373 = sshll.u32 [#allocation4], 4
          %s374 = int_to_ptr.vmem [resolvable:$true] %s373
          %379 = dma.hbm_to_vmem [thread:$0]  %s372, 128, %s374, [#allocation5], 64, 64, 4
        $region16: #{tpu_custom_call.1} parent=11 // pred_fallthru
          _
        // Predicated region
        $region17: #{tpu_custom_call.1} parent=11 // pred_check
          %p380 = pneg %p90
        $region18: #{tpu_custom_call.1} parent=11 // pred_check_branch
          %382 = sbr.rel (%p380) target = $region20
        $region19: #{tpu_custom_call.1} parent=11 // pred_region
          %s383 = smul.u32 2, %s36
          %s385 = ssub.s32 128, 128
          %386 = vsyncadd [#allocation8], %s385
          %s387 = smul.addr %s383, 64
          %s388 = scalar_lea.hbm %s1, %s387
          %s389 = sshll.u32 [#allocation7], 4
          %s390 = int_to_ptr.vmem [resolvable:$true] %s389
          %395 = dma.hbm_to_vmem [thread:$0]  %s388, 128, %s390, [#allocation8], 64, 64, 4
        $region20: #{tpu_custom_call.1} parent=11 // pred_fallthru
          _
        // Predicated region
        $region21: #{tpu_custom_call.1} parent=11 // pred_check
          %p396 = pneg %p111
        $region22: #{tpu_custom_call.1} parent=11 // pred_check_branch
          %398 = sbr.rel (%p396) target = $region24
        $region23: #{tpu_custom_call.1} parent=11 // pred_region
          %s400 = ssub.s32 1024, 1024
          %401 = vsyncadd [#allocation8], %s400
          %s402 = sshll.u32 [#allocation9], 4
          %s403 = int_to_ptr.vmem [resolvable:$true] %s402
          %408 = dma.hbm_to_vmem [thread:$0]  %s2, 1024, %s403, [#allocation8], 64, 64, 4
        $region24: #{tpu_custom_call.1} parent=11 // pred_fallthru
          _
        // Predicated region
        $region25: #{tpu_custom_call.1} parent=11 // pred_check
          %p409 = pneg %p132
        $region26: #{tpu_custom_call.1} parent=11 // pred_check_branch
          %411 = sbr.rel (%p409) target = $region28
        $region27: #{tpu_custom_call.1} parent=11 // pred_region
          _
        $region28: #{tpu_custom_call.1} parent=11 // pred_fallthru
          _
        // Predicated region
        $region29: #{tpu_custom_call.1} parent=11 // pred_check
          %p412 = pneg %p153
        $region30: #{tpu_custom_call.1} parent=11 // pred_check_branch
          %414 = sbr.rel (%p412) target = $region32
        $region31: #{tpu_custom_call.1} parent=11 // pred_region
          %s416 = ssub.s32 1024, 1024
          %417 = vsyncadd [#allocation11], %s416
          %s418 = sshll.u32 [#allocation10], 4
          %s419 = int_to_ptr.vmem [resolvable:$true] %s418
          %424 = dma.hbm_to_vmem [thread:$0]  %s4, 1024, %s419, [#allocation11], 64, 64, 4
        $region32: #{tpu_custom_call.1} parent=11 // pred_fallthru
          _
        // Predicated region
        $region33: #{tpu_custom_call.1} parent=11 // pred_check
          %p425 = pneg %p174
        $region34: #{tpu_custom_call.1} parent=11 // pred_check_branch
          %427 = sbr.rel (%p425) target = $region36
        $region35: #{tpu_custom_call.1} parent=11 // pred_region
          _
        $region36: #{tpu_custom_call.1} parent=11 // pred_fallthru
          _
        // Predicated region
        $region37: #{tpu_custom_call.1} parent=11 // pred_check
          %p428 = pneg %p195
        $region38: #{tpu_custom_call.1} parent=11 // pred_check_branch
          %430 = sbr.rel (%p428) target = $region40
        $region39: #{tpu_custom_call.1} parent=11 // pred_region
          %s432 = ssub.s32 2048, 2048
          %433 = vsyncadd [#allocation11], %s432
          %s434 = sshll.u32 [#allocation12], 4
          %s435 = int_to_ptr.vmem [resolvable:$true] %s434
          %440 = dma.hbm_to_vmem [thread:$0]  %s6, 2048, %s435, [#allocation11], 128, 128, 8
        $region40: #{tpu_custom_call.1} parent=11 // pred_fallthru
          _
        // Predicated region
        $region41: #{tpu_custom_call.1} parent=11 // pred_check
          %p441 = pneg %p216
        $region42: #{tpu_custom_call.1} parent=11 // pred_check_branch
          %443 = sbr.rel (%p441) target = $region44
        $region43: #{tpu_custom_call.1} parent=11 // pred_region
          %s445 = ssub.s32 2048, 2048
          %446 = vsyncadd [#allocation14], %s445
          %s447 = sshll.u32 [#allocation13], 4
          %s448 = int_to_ptr.vmem [resolvable:$true] %s447
          %453 = dma.hbm_to_vmem [thread:$0]  %s7, 2048, %s448, [#allocation14], 128, 128, 8
        $region44: #{tpu_custom_call.1} parent=11 // pred_fallthru
          _
        // Predicated region
        $region45: #{tpu_custom_call.1} parent=11 // pred_check
          %p454 = pneg %p237
        $region46: #{tpu_custom_call.1} parent=11 // pred_check_branch
          %456 = sbr.rel (%p454) target = $region48
        $region47: #{tpu_custom_call.1} parent=11 // pred_region
          _
        $region48: #{tpu_custom_call.1} parent=11 // pred_fallthru
          _
        // Predicated region
        $region49: #{tpu_custom_call.1} parent=11 // pred_check
          %p457 = pneg %p258
        $region50: #{tpu_custom_call.1} parent=11 // pred_check_branch
          %459 = sbr.rel (%p457) target = $region52
        $region51: #{tpu_custom_call.1} parent=11 // pred_region
          _
        $region52: #{tpu_custom_call.1} parent=11 // pred_fallthru
          _
        // Predicated region
        $region53: #{tpu_custom_call.1} parent=11 // pred_check
          %p460 = pneg %p279
        $region54: #{tpu_custom_call.1} parent=11 // pred_check_branch
          %462 = sbr.rel (%p460) target = $region56
        $region55: #{tpu_custom_call.1} parent=11 // pred_region
          _
        $region56: #{tpu_custom_call.1} parent=11 // pred_fallthru
          _
        // Predicated region
        $region57: #{tpu_custom_call.1} parent=11 // pred_check
          %p463 = pneg %p300
        $region58: #{tpu_custom_call.1} parent=11 // pred_check_branch
          %465 = sbr.rel (%p463) target = $region60
        $region59: #{tpu_custom_call.1} parent=11 // pred_region
          _
        $region60: #{tpu_custom_call.1} parent=11 // pred_fallthru
          _
        // Predicated region
        $region61: #{tpu_custom_call.1} parent=11 // pred_check
          %p466 = pneg %p321
        $region62: #{tpu_custom_call.1} parent=11 // pred_check_branch
          %468 = sbr.rel (%p466) target = $region64
        $region63: #{tpu_custom_call.1} parent=11 // pred_region
          _
        $region64: #{tpu_custom_call.1} parent=11 // pred_fallthru
          _
      $region12: #{tpu_custom_call.1} parent=5 // pred_fallthru
        _
      %p469 = scmp.lt.s32.totalorder %s26, 2
      // Predicated region
      $region65: #{tpu_custom_call.1} parent=5 // pred_check
        %p470 = pneg %p469
      $region66: #{tpu_custom_call.1} parent=5 // pred_check_branch
        %472 = sbr.rel (%p470) target = $region68
      $region67: #{tpu_custom_call.1} parent=5 // pred_region
        _
      $region68: #{tpu_custom_call.1} parent=5 // pred_fallthru
        _
      %p473 = scmp.le.s32.totalorder 1, %s26
      %p474 = scmp.lt.s32.totalorder %s26, 3
      %p475 = pnand %p473, %p474
      %p476 = pneg %p475
      // Predicated region
      $region69: #{tpu_custom_call.1} parent=5 // pred_check
        _
      $region70: #{tpu_custom_call.1} parent=5 // pred_check_branch
        %478 = sbr.rel (%p475) target = $region72
      $region71: #{tpu_custom_call.1} parent=5 // pred_region
        %s479 = ssub.s32 %s26, 1
        // Predicated region
        $region73: #{tpu_custom_call.1} parent=71 // pred_check
          %p480 = pneg %p64
        $region74: #{tpu_custom_call.1} parent=71 // pred_check_branch
          %482 = sbr.rel (%p480) target = $region76
        $region75: #{tpu_custom_call.1} parent=71 // pred_region
          %483 = dma.done [#allocation5], 128
        $region76: #{tpu_custom_call.1} parent=71 // pred_fallthru
          _
        // Predicated region
        $region77: #{tpu_custom_call.1} parent=71 // pred_check
          %p484 = pneg %p90
        $region78: #{tpu_custom_call.1} parent=71 // pred_check_branch
          %486 = sbr.rel (%p484) target = $region80
        $region79: #{tpu_custom_call.1} parent=71 // pred_region
          %487 = dma.done [#allocation8], 128
        $region80: #{tpu_custom_call.1} parent=71 // pred_fallthru
          _
        // Predicated region
        $region81: #{tpu_custom_call.1} parent=71 // pred_check
          %p488 = pneg %p111
        $region82: #{tpu_custom_call.1} parent=71 // pred_check_branch
          %490 = sbr.rel (%p488) target = $region84
        $region83: #{tpu_custom_call.1} parent=71 // pred_region
          %491 = dma.done [#allocation8], 1024
        $region84: #{tpu_custom_call.1} parent=71 // pred_fallthru
          _
        // Predicated region
        $region85: #{tpu_custom_call.1} parent=71 // pred_check
          %p492 = pneg %p153
        $region86: #{tpu_custom_call.1} parent=71 // pred_check_branch
          %494 = sbr.rel (%p492) target = $region88
        $region87: #{tpu_custom_call.1} parent=71 // pred_region
          %495 = dma.done [#allocation11], 1024
        $region88: #{tpu_custom_call.1} parent=71 // pred_fallthru
          _
        // Predicated region
        $region89: #{tpu_custom_call.1} parent=71 // pred_check
          %p496 = pneg %p195
        $region90: #{tpu_custom_call.1} parent=71 // pred_check_branch
          %498 = sbr.rel (%p496) target = $region92
        $region91: #{tpu_custom_call.1} parent=71 // pred_region
          %499 = dma.done [#allocation11], 2048
        $region92: #{tpu_custom_call.1} parent=71 // pred_fallthru
          _
        // Predicated region
        $region93: #{tpu_custom_call.1} parent=71 // pred_check
          %p500 = pneg %p216
        $region94: #{tpu_custom_call.1} parent=71 // pred_check_branch
          %502 = sbr.rel (%p500) target = $region96
        $region95: #{tpu_custom_call.1} parent=71 // pred_region
          %503 = dma.done [#allocation14], 2048
        $region96: #{tpu_custom_call.1} parent=71 // pred_fallthru
          _
        %p504 = pneg %p64
        %p505 = pneg %p61
        %p506 = pneg %p90
        %p507 = pneg %p87
        %p508 = pneg %p111
        %p509 = pneg %p108
        %p510 = pneg %p132
        %p511 = pneg %p129
        %p512 = pneg %p153
        %p513 = pneg %p150
        %p514 = pneg %p174
        %p515 = pneg %p171
        %p516 = pneg %p195
        %p517 = pneg %p192
        %p518 = pneg %p216
        %p519 = pneg %p213
        %p520 = pneg %p237
        %p521 = pneg %p234
        %p522 = pneg %p258
        %p523 = pneg %p255
        %p524 = pneg %p279
        %p525 = pneg %p276
        %p526 = pneg %p300
        %p527 = pneg %p297
        %p528 = pneg %p321
        %p529 = pneg %p318
        %p530 = pneg %p349
        %p531 = pneg %p346
        %s532 = sand.u32 %s336, 1
        %s533 = scalar_lea.sflag [#allocation6], %s532
        %s534 = sand.u32 %s336, 1
        %s535 = smul.addr %s534, 16
        %s536 = scalar_lea.vmem [#allocation15], %s535
        %s537 = smul.u32 2, %s36
        %s538 = smul.u32 2, %s36
        %s539 = smul.u32 %s35, %s36
        %s540 = smul.u32 2, %s539
        %s542 = smul.u32 %s36, 16
        %v543 = vlaneseq
        %v544 = vshrl.u32 %v543, 7
        %v545 = vadd.s32 %v544, 8
        %v546 = vstv %s542
        %v547 = vadd.s32 %v546, %v544
        %v548 = vadd.s32 %v546, %v545
        %vm549 = vcmp.lt.s32.totalorder %v547, 8
        %vm550 = vcmp.lt.s32.totalorder %v548, 8
        %v551 = vsel %vm549, 1, 0
        %v552 = vsel %vm550, 1, 0
        %v553 = vcvt.s32.f32 %v551
        %v554 = vcvt.s32.f32 %v552
        %v555 = vld [vmem:[#allocation4] sm:$0xf]
        %v556 = vld [vmem:[#allocation4 + $0x4] sm:$0xf]
        %v557 = vld [vmem:[#allocation9] sm:$0xf]
        %v558 = vld [vmem:[#allocation9 + $0x4] sm:$0xf]
        %v559 = vld [vmem:[#allocation9 + $0x8] sm:$0xf]
        %v560 = vld [vmem:[#allocation9 + $0xc] sm:$0xf]
        %v561 = vld [vmem:[#allocation9 + $0x10] sm:$0xf]
        %v562 = vld [vmem:[#allocation9 + $0x14] sm:$0xf]
        %v563 = vld [vmem:[#allocation9 + $0x18] sm:$0xf]
        %v564 = vld [vmem:[#allocation9 + $0x1c] sm:$0xf]
        %v565 = vld [vmem:[#allocation9 + $0x20] sm:$0xf]
        %v566 = vld [vmem:[#allocation9 + $0x24] sm:$0xf]
        %v567 = vld [vmem:[#allocation9 + $0x28] sm:$0xf]
        %v568 = vld [vmem:[#allocation9 + $0x2c] sm:$0xf]
        %v569 = vld [vmem:[#allocation9 + $0x30] sm:$0xf]
        %v570 = vld [vmem:[#allocation9 + $0x34] sm:$0xf]
        %v571 = vld [vmem:[#allocation9 + $0x38] sm:$0xf]
        %v572 = vld [vmem:[#allocation9 + $0x3c] sm:$0xf]
        %v573 = vld [vmem:[%s3] sm:$0x1]
        %v575 = vlaneseq
        %v576 = vshrl.u32 %v575, 7
        %v577 = vsub.s32 0, %v576
        %v578 = vrot.slane %v573, %v577
        %v582 = vunpack.c.l.b16 %v555
        %v583 = vunpack.c.l.b16 %v556
        %v584 = vpack.c.b16 %v583, %v582
        %v602 = vunpack.c.l.b16 %v557
        %v603 = vunpack.c.l.b16 %v558
        %v604 = vunpack.c.l.b16 %v559
        %v605 = vunpack.c.l.b16 %v560
        %v606 = vunpack.c.l.b16 %v561
        %v607 = vunpack.c.l.b16 %v562
        %v608 = vunpack.c.l.b16 %v563
        %v609 = vunpack.c.l.b16 %v564
        %v610 = vunpack.c.l.b16 %v565
        %v611 = vunpack.c.l.b16 %v566
        %v612 = vunpack.c.l.b16 %v567
        %v613 = vunpack.c.l.b16 %v568
        %v614 = vunpack.c.l.b16 %v569
        %v615 = vunpack.c.l.b16 %v570
        %v616 = vunpack.c.l.b16 %v571
        %v617 = vunpack.c.l.b16 %v572
        %v618 = vpack.c.b16 %v603, %v602
        %v619 = vpack.c.b16 %v605, %v604
        %v620 = vpack.c.b16 %v607, %v606
        %v621 = vpack.c.b16 %v609, %v608
        %v622 = vpack.c.b16 %v611, %v610
        %v623 = vpack.c.b16 %v613, %v612
        %v624 = vpack.c.b16 %v615, %v614
        %v625 = vpack.c.b16 %v617, %v616
        %634 = vmatprep.subr.bf16.mxu0 0
        %635 = vmatpush1.bf16.msra.mxu0 %v618
        %636 = vmatprep.subr.bf16.mxu0 0
        %637 = vmatpush1.bf16.msra.mxu0 %v619
        %638 = vmatprep.subr.bf16.mxu0 0
        %639 = vmatpush1.bf16.msra.mxu0 %v620
        %640 = vmatprep.subr.bf16.mxu0 0
        %641 = vmatpush1.bf16.msra.mxu0 %v621
        %642 = vmatprep.subr.bf16.mxu0 0
        %643 = vmatpush1.bf16.msra.mxu0 %v622
        %644 = vmatprep.subr.bf16.mxu0 0
        %645 = vmatpush1.bf16.msra.mxu0 %v623
        %646 = vmatprep.subr.bf16.mxu0 0
        %647 = vmatpush1.bf16.msra.mxu0 %v624
        %648 = vmatprep.subr.bf16.mxu0 0
        %649 = vmatpush1.bf16.msra.mxu0 %v625
        %650 = vmatprep.subr.bf16.mxu0 0
        %651 = vmatpush1.bf16.msra.mxu0 0
        %652 = vmatprep.subr.bf16.mxu0 0
        %653 = vmatpush1.bf16.msra.mxu0 0
        %654 = vmatprep.subr.bf16.mxu0 0
        %655 = vmatpush1.bf16.msra.mxu0 0
        %656 = vmatprep.subr.bf16.mxu0 0
        %657 = vmatpush1.bf16.msra.mxu0 0
        %658 = vmatprep.subr.bf16.mxu0 0
        %659 = vmatpush1.bf16.msra.mxu0 0
        %660 = vmatprep.subr.bf16.mxu0 0
        %661 = vmatpush1.bf16.msra.mxu0 0
        %662 = vmatprep.subr.bf16.mxu0 0
        %663 = vmatpush1.bf16.msra.mxu0 0
        %664 = vmatprep.subr.bf16.mxu0 0
        %665 = vmatpush1.bf16.msra.mxu0 0
        %666 = vmatprep.mubr.bf16.mxu0 0
        %667 = vmatmul.mubr.bf16.gmra.mrb[0].mxu0 %v584
        %v668 = vpop.f32.mrb[0].mxu0
        %v669 = vadd.f32 %v578, %v668
        %v670 = vpop.f32.mrb[0].mxu0
        %v671 = vpop.f32.mrb[0].mxu0
        %v672 = vadd.f32 %v578, %v671
        %v673 = vpop.f32.mrb[0].mxu0
        %674 = vdwg.mxu0
        %v675 = vld [vmem:[#allocation7] sm:$0xf]
        %v676 = vld [vmem:[#allocation7 + $0x4] sm:$0xf]
        %v677 = vld [vmem:[#allocation10] sm:$0xf]
        %v678 = vld [vmem:[#allocation10 + $0x4] sm:$0xf]
        %v679 = vld [vmem:[#allocation10 + $0x8] sm:$0xf]
        %v680 = vld [vmem:[#allocation10 + $0xc] sm:$0xf]
        %v681 = vld [vmem:[#allocation10 + $0x10] sm:$0xf]
        %v682 = vld [vmem:[#allocation10 + $0x14] sm:$0xf]
        %v683 = vld [vmem:[#allocation10 + $0x18] sm:$0xf]
        %v684 = vld [vmem:[#allocation10 + $0x1c] sm:$0xf]
        %v685 = vld [vmem:[#allocation10 + $0x20] sm:$0xf]
        %v686 = vld [vmem:[#allocation10 + $0x24] sm:$0xf]
        %v687 = vld [vmem:[#allocation10 + $0x28] sm:$0xf]
        %v688 = vld [vmem:[#allocation10 + $0x2c] sm:$0xf]
        %v689 = vld [vmem:[#allocation10 + $0x30] sm:$0xf]
        %v690 = vld [vmem:[#allocation10 + $0x34] sm:$0xf]
        %v691 = vld [vmem:[#allocation10 + $0x38] sm:$0xf]
        %v692 = vld [vmem:[#allocation10 + $0x3c] sm:$0xf]
        %v693 = vld [vmem:[%s5] sm:$0x1]
        %v695 = vlaneseq
        %v696 = vshrl.u32 %v695, 7
        %v697 = vsub.s32 0, %v696
        %v698 = vrot.slane %v693, %v697
        %v702 = vunpack.c.l.b16 %v675
        %v703 = vunpack.c.l.b16 %v676
        %v704 = vpack.c.b16 %v703, %v702
        %v722 = vunpack.c.l.b16 %v677
        %v723 = vunpack.c.l.b16 %v678
        %v724 = vunpack.c.l.b16 %v679
        %v725 = vunpack.c.l.b16 %v680
        %v726 = vunpack.c.l.b16 %v681
        %v727 = vunpack.c.l.b16 %v682
        %v728 = vunpack.c.l.b16 %v683
        %v729 = vunpack.c.l.b16 %v684
        %v730 = vunpack.c.l.b16 %v685
        %v731 = vunpack.c.l.b16 %v686
        %v732 = vunpack.c.l.b16 %v687
        %v733 = vunpack.c.l.b16 %v688
        %v734 = vunpack.c.l.b16 %v689
        %v735 = vunpack.c.l.b16 %v690
        %v736 = vunpack.c.l.b16 %v691
        %v737 = vunpack.c.l.b16 %v692
        %v738 = vpack.c.b16 %v723, %v722
        %v739 = vpack.c.b16 %v725, %v724
        %v740 = vpack.c.b16 %v727, %v726
        %v741 = vpack.c.b16 %v729, %v728
        %v742 = vpack.c.b16 %v731, %v730
        %v743 = vpack.c.b16 %v733, %v732
        %v744 = vpack.c.b16 %v735, %v734
        %v745 = vpack.c.b16 %v737, %v736
        %754 = vmatprep.subr.bf16.mxu0 0
        %755 = vmatpush1.bf16.msra.mxu0 %v738
        %756 = vmatprep.subr.bf16.mxu0 0
        %757 = vmatpush1.bf16.msra.mxu0 %v739
        %758 = vmatprep.subr.bf16.mxu0 0
        %759 = vmatpush1.bf16.msra.mxu0 %v740
        %760 = vmatprep.subr.bf16.mxu0 0
        %761 = vmatpush1.bf16.msra.mxu0 %v741
        %762 = vmatprep.subr.bf16.mxu0 0
        %763 = vmatpush1.bf16.msra.mxu0 %v742
        %764 = vmatprep.subr.bf16.mxu0 0
        %765 = vmatpush1.bf16.msra.mxu0 %v743
        %766 = vmatprep.subr.bf16.mxu0 0
        %767 = vmatpush1.bf16.msra.mxu0 %v744
        %768 = vmatprep.subr.bf16.mxu0 0
        %769 = vmatpush1.bf16.msra.mxu0 %v745
        %770 = vmatprep.subr.bf16.mxu0 0
        %771 = vmatpush1.bf16.msra.mxu0 0
        %772 = vmatprep.subr.bf16.mxu0 0
        %773 = vmatpush1.bf16.msra.mxu0 0
        %774 = vmatprep.subr.bf16.mxu0 0
        %775 = vmatpush1.bf16.msra.mxu0 0
        %776 = vmatprep.subr.bf16.mxu0 0
        %777 = vmatpush1.bf16.msra.mxu0 0
        %778 = vmatprep.subr.bf16.mxu0 0
        %779 = vmatpush1.bf16.msra.mxu0 0
        %780 = vmatprep.subr.bf16.mxu0 0
        %781 = vmatpush1.bf16.msra.mxu0 0
        %782 = vmatprep.subr.bf16.mxu0 0
        %783 = vmatpush1.bf16.msra.mxu0 0
        %784 = vmatprep.subr.bf16.mxu0 0
        %785 = vmatpush1.bf16.msra.mxu0 0
        %786 = vmatprep.mubr.bf16.mxu0 0
        %787 = vmatmul.mubr.bf16.gmra.mrb[0].mxu0 %v704
        %v788 = vpop.f32.mrb[0].mxu0
        %v789 = vadd.f32 %v698, %v788
        %v790 = vpop.f32.mrb[0].mxu0
        %v791 = vpop.f32.mrb[0].mxu0
        %v792 = vadd.f32 %v698, %v791
        %v793 = vpop.f32.mrb[0].mxu0
        %794 = vdwg.mxu0
        %v795 = vpack.c.bf16 %v672, %v669
        %v796 = vld [vmem:[#allocation12] sm:$0xff]
        %v797 = vld [vmem:[#allocation12 + $0x8] sm:$0xff]
        %v798 = vld [vmem:[#allocation12 + $0x10] sm:$0xff]
        %v799 = vld [vmem:[#allocation12 + $0x18] sm:$0xff]
        %v800 = vld [vmem:[#allocation12 + $0x20] sm:$0xff]
        %v801 = vld [vmem:[#allocation12 + $0x28] sm:$0xff]
        %v802 = vld [vmem:[#allocation12 + $0x30] sm:$0xff]
        %v803 = vld [vmem:[#allocation12 + $0x38] sm:$0xff]
        %v804 = vld [vmem:[#allocation12 + $0x40] sm:$0xff]
        %v805 = vld [vmem:[#allocation12 + $0x48] sm:$0xff]
        %v806 = vld [vmem:[#allocation12 + $0x50] sm:$0xff]
        %v807 = vld [vmem:[#allocation12 + $0x58] sm:$0xff]
        %v808 = vld [vmem:[#allocation12 + $0x60] sm:$0xff]
        %v809 = vld [vmem:[#allocation12 + $0x68] sm:$0xff]
        %v810 = vld [vmem:[#allocation12 + $0x70] sm:$0xff]
        %v811 = vld [vmem:[#allocation12 + $0x78] sm:$0xff]
        %v828 = vunpack.c.l.b16 %v796
        %v829 = vunpack.c.h.b16 %v796
        %v830 = vunpack.c.l.b16 %v797
        %v831 = vunpack.c.h.b16 %v797
        %v832 = vunpack.c.l.b16 %v798
        %v833 = vunpack.c.h.b16 %v798
        %v834 = vunpack.c.l.b16 %v799
        %v835 = vunpack.c.h.b16 %v799
        %v836 = vunpack.c.l.b16 %v800
        %v837 = vunpack.c.h.b16 %v800
        %v838 = vunpack.c.l.b16 %v801
        %v839 = vunpack.c.h.b16 %v801
        %v840 = vunpack.c.l.b16 %v802
        %v841 = vunpack.c.h.b16 %v802
        %v842 = vunpack.c.l.b16 %v803
        %v843 = vunpack.c.h.b16 %v803
        %v844 = vunpack.c.l.b16 %v804
        %v845 = vunpack.c.h.b16 %v804
        %v846 = vunpack.c.l.b16 %v805
        %v847 = vunpack.c.h.b16 %v805
        %v848 = vunpack.c.l.b16 %v806
        %v849 = vunpack.c.h.b16 %v806
        %v850 = vunpack.c.l.b16 %v807
        %v851 = vunpack.c.h.b16 %v807
        %v852 = vunpack.c.l.b16 %v808
        %v853 = vunpack.c.h.b16 %v808
        %v854 = vunpack.c.l.b16 %v809
        %v855 = vunpack.c.h.b16 %v809
        %v856 = vunpack.c.l.b16 %v810
        %v857 = vunpack.c.h.b16 %v810
        %v858 = vunpack.c.l.b16 %v811
        %v859 = vunpack.c.h.b16 %v811
        %v860 = vpack.c.b16 %v830, %v828
        %v861 = vpack.c.b16 %v831, %v829
        %v862 = vpack.c.b16 %v834, %v832
        %v863 = vpack.c.b16 %v835, %v833
        %v864 = vpack.c.b16 %v838, %v836
        %v865 = vpack.c.b16 %v839, %v837
        %v866 = vpack.c.b16 %v842, %v840
        %v867 = vpack.c.b16 %v843, %v841
        %v868 = vpack.c.b16 %v846, %v844
        %v869 = vpack.c.b16 %v847, %v845
        %v870 = vpack.c.b16 %v850, %v848
        %v871 = vpack.c.b16 %v851, %v849
        %v872 = vpack.c.b16 %v854, %v852
        %v873 = vpack.c.b16 %v855, %v853
        %v874 = vpack.c.b16 %v858, %v856
        %v875 = vpack.c.b16 %v859, %v857
        %892 = vmatprep.subr.bf16.mxu0 %v861
        %893 = vmatpush1.bf16.msra.mxu0 %v860
        %894 = vmatprep.subr.bf16.mxu0 %v863
        %895 = vmatpush1.bf16.msra.mxu0 %v862
        %896 = vmatprep.subr.bf16.mxu0 %v865
        %897 = vmatpush1.bf16.msra.mxu0 %v864
        %898 = vmatprep.subr.bf16.mxu0 %v867
        %899 = vmatpush1.bf16.msra.mxu0 %v866
        %900 = vmatprep.subr.bf16.mxu0 %v869
        %901 = vmatpush1.bf16.msra.mxu0 %v868
        %902 = vmatprep.subr.bf16.mxu0 %v871
        %903 = vmatpush1.bf16.msra.mxu0 %v870
        %904 = vmatprep.subr.bf16.mxu0 %v873
        %905 = vmatpush1.bf16.msra.mxu0 %v872
        %906 = vmatprep.subr.bf16.mxu0 %v875
        %907 = vmatpush1.bf16.msra.mxu0 %v874
        %908 = vmatprep.subr.bf16.mxu0 0
        %909 = vmatpush1.bf16.msra.mxu0 0
        %910 = vmatprep.subr.bf16.mxu0 0
        %911 = vmatpush1.bf16.msra.mxu0 0
        %912 = vmatprep.subr.bf16.mxu0 0
        %913 = vmatpush1.bf16.msra.mxu0 0
        %914 = vmatprep.subr.bf16.mxu0 0
        %915 = vmatpush1.bf16.msra.mxu0 0
        %916 = vmatprep.subr.bf16.mxu0 0
        %917 = vmatpush1.bf16.msra.mxu0 0
        %918 = vmatprep.subr.bf16.mxu0 0
        %919 = vmatpush1.bf16.msra.mxu0 0
        %920 = vmatprep.subr.bf16.mxu0 0
        %921 = vmatpush1.bf16.msra.mxu0 0
        %922 = vmatprep.subr.bf16.mxu0 0
        %923 = vmatpush1.bf16.msra.mxu0 0
        %924 = vmatprep.mubr.bf16.mxu0 0
        %925 = vmatmul.mubr.bf16.gmra.mrb[0].mxu0 %v795
        %v926 = vpop.f32.mrb[0].mxu0
        %v927 = vadd.f32 0.0, %v926
        %v928 = vpop.f32.mrb[0].mxu0
        %v929 = vadd.f32 0.0, %v928
        %v930 = vpop.f32.mrb[0].mxu0
        %v931 = vadd.f32 0.0, %v930
        %v932 = vpop.f32.mrb[0].mxu0
        %v933 = vadd.f32 0.0, %v932
        %934 = vdwg.mxu0
        %v935 = vpack.c.bf16 %v792, %v789
        %v936 = vld [vmem:[#allocation13] sm:$0xff]
        %v937 = vld [vmem:[#allocation13 + $0x8] sm:$0xff]
        %v938 = vld [vmem:[#allocation13 + $0x10] sm:$0xff]
        %v939 = vld [vmem:[#allocation13 + $0x18] sm:$0xff]
        %v940 = vld [vmem:[#allocation13 + $0x20] sm:$0xff]
        %v941 = vld [vmem:[#allocation13 + $0x28] sm:$0xff]
        %v942 = vld [vmem:[#allocation13 + $0x30] sm:$0xff]
        %v943 = vld [vmem:[#allocation13 + $0x38] sm:$0xff]
        %v944 = vld [vmem:[#allocation13 + $0x40] sm:$0xff]
        %v945 = vld [vmem:[#allocation13 + $0x48] sm:$0xff]
        %v946 = vld [vmem:[#allocation13 + $0x50] sm:$0xff]
        %v947 = vld [vmem:[#allocation13 + $0x58] sm:$0xff]
        %v948 = vld [vmem:[#allocation13 + $0x60] sm:$0xff]
        %v949 = vld [vmem:[#allocation13 + $0x68] sm:$0xff]
        %v950 = vld [vmem:[#allocation13 + $0x70] sm:$0xff]
        %v951 = vld [vmem:[#allocation13 + $0x78] sm:$0xff]
        %v968 = vunpack.c.l.b16 %v936
        %v969 = vunpack.c.h.b16 %v936
        %v970 = vunpack.c.l.b16 %v937
        %v971 = vunpack.c.h.b16 %v937
        %v972 = vunpack.c.l.b16 %v938
        %v973 = vunpack.c.h.b16 %v938
        %v974 = vunpack.c.l.b16 %v939
        %v975 = vunpack.c.h.b16 %v939
        %v976 = vunpack.c.l.b16 %v940
        %v977 = vunpack.c.h.b16 %v940
        %v978 = vunpack.c.l.b16 %v941
        %v979 = vunpack.c.h.b16 %v941
        %v980 = vunpack.c.l.b16 %v942
        %v981 = vunpack.c.h.b16 %v942
        %v982 = vunpack.c.l.b16 %v943
        %v983 = vunpack.c.h.b16 %v943
        %v984 = vunpack.c.l.b16 %v944
        %v985 = vunpack.c.h.b16 %v944
        %v986 = vunpack.c.l.b16 %v945
        %v987 = vunpack.c.h.b16 %v945
        %v988 = vunpack.c.l.b16 %v946
        %v989 = vunpack.c.h.b16 %v946
        %v990 = vunpack.c.l.b16 %v947
        %v991 = vunpack.c.h.b16 %v947
        %v992 = vunpack.c.l.b16 %v948
        %v993 = vunpack.c.h.b16 %v948
        %v994 = vunpack.c.l.b16 %v949
        %v995 = vunpack.c.h.b16 %v949
        %v996 = vunpack.c.l.b16 %v950
        %v997 = vunpack.c.h.b16 %v950
        %v998 = vunpack.c.l.b16 %v951
        %v999 = vunpack.c.h.b16 %v951
        %v1000 = vpack.c.b16 %v970, %v968
        %v1001 = vpack.c.b16 %v971, %v969
        %v1002 = vpack.c.b16 %v974, %v972
        %v1003 = vpack.c.b16 %v975, %v973
        %v1004 = vpack.c.b16 %v978, %v976
        %v1005 = vpack.c.b16 %v979, %v977
        %v1006 = vpack.c.b16 %v982, %v980
        %v1007 = vpack.c.b16 %v983, %v981
        %v1008 = vpack.c.b16 %v986, %v984
        %v1009 = vpack.c.b16 %v987, %v985
        %v1010 = vpack.c.b16 %v990, %v988
        %v1011 = vpack.c.b16 %v991, %v989
        %v1012 = vpack.c.b16 %v994, %v992
        %v1013 = vpack.c.b16 %v995, %v993
        %v1014 = vpack.c.b16 %v998, %v996
        %v1015 = vpack.c.b16 %v999, %v997
        %1032 = vmatprep.subr.bf16.mxu0 %v1001
        %1033 = vmatpush1.bf16.msra.mxu0 %v1000
        %1034 = vmatprep.subr.bf16.mxu0 %v1003
        %1035 = vmatpush1.bf16.msra.mxu0 %v1002
        %1036 = vmatprep.subr.bf16.mxu0 %v1005
        %1037 = vmatpush1.bf16.msra.mxu0 %v1004
        %1038 = vmatprep.subr.bf16.mxu0 %v1007
        %1039 = vmatpush1.bf16.msra.mxu0 %v1006
        %1040 = vmatprep.subr.bf16.mxu0 %v1009
        %1041 = vmatpush1.bf16.msra.mxu0 %v1008
        %1042 = vmatprep.subr.bf16.mxu0 %v1011
        %1043 = vmatpush1.bf16.msra.mxu0 %v1010
        %1044 = vmatprep.subr.bf16.mxu0 %v1013
        %1045 = vmatpush1.bf16.msra.mxu0 %v1012
        %1046 = vmatprep.subr.bf16.mxu0 %v1015
        %1047 = vmatpush1.bf16.msra.mxu0 %v1014
        %1048 = vmatprep.subr.bf16.mxu0 0
        %1049 = vmatpush1.bf16.msra.mxu0 0
        %1050 = vmatprep.subr.bf16.mxu0 0
        %1051 = vmatpush1.bf16.msra.mxu0 0
        %1052 = vmatprep.subr.bf16.mxu0 0
        %1053 = vmatpush1.bf16.msra.mxu0 0
        %1054 = vmatprep.subr.bf16.mxu0 0
        %1055 = vmatpush1.bf16.msra.mxu0 0
        %1056 = vmatprep.subr.bf16.mxu0 0
        %1057 = vmatpush1.bf16.msra.mxu0 0
        %1058 = vmatprep.subr.bf16.mxu0 0
        %1059 = vmatpush1.bf16.msra.mxu0 0
        %1060 = vmatprep.subr.bf16.mxu0 0
        %1061 = vmatpush1.bf16.msra.mxu0 0
        %1062 = vmatprep.subr.bf16.mxu0 0
        %1063 = vmatpush1.bf16.msra.mxu0 0
        %1064 = vmatprep.mubr.bf16.mxu0 0
        %1065 = vmatmul.mubr.bf16.gmra.mrb[0].mxu0 %v935
        %v1066 = vpop.f32.mrb[0].mxu0
        %v1067 = vadd.f32 0.0, %v1066
        %v1068 = vpop.f32.mrb[0].mxu0
        %v1069 = vadd.f32 0.0, %v1068
        %v1070 = vpop.f32.mrb[0].mxu0
        %v1071 = vadd.f32 0.0, %v1070
        %v1072 = vpop.f32.mrb[0].mxu0
        %v1073 = vadd.f32 0.0, %v1072
        %1074 = vdwg.mxu0
        %v1075 = vadd.f32 %v927, %v1067
        %v1076 = vadd.f32 %v931, %v1071
        %v1077 = vld [vmem:[%s8] sm:$0x1]
        %v1079 = vlaneseq
        %v1080 = vshrl.u32 %v1079, 7
        %v1081 = vsub.s32 0, %v1080
        %v1082 = vrot.slane %v1077, %v1081
        %v1084 = vadd.f32 %v1075, %v1082
        %v1085 = vadd.f32 %v1076, %v1082
        %v1086 = vtanh.pop %v1084
        %v1087 = vtanh.pop %v1085
        %v1088 = vld [vmem:[%s9] sm:$0x1]
        %v1090 = vlaneseq
        %v1091 = vshrl.u32 %v1090, 7
        %v1092 = vsub.s32 0, %v1091
        %v1093 = vrot.slane %v1088, %v1092
        %v1095 = vmul.f32 %v1086, %v1093
        %v1096 = vmul.f32 %v1087, %v1093
        %1097 = vadd.xlane.f32.xlu0 %v1095
        %v1098 = vpop.xlane.xlu0 %1097
        %1099 = vadd.xlane.f32.xlu0 %v1096
        %v1100 = vpop.xlane.xlu0 %1099
        %v1101 = vsel %vm549, %v1098, -1e+30
        %v1102 = vsel %vm550, %v1100, -1e+30
        %p1103 = scmp.eq.s32.totalorder %s35, 0
        %p1104 = scmp.eq.s32.totalorder %s36, 0
        %p1105 = pnand %p1103, %p1104
        %p1106 = pneg %p1105
        // Predicated region
        $region97: #{tpu_custom_call.1} parent=71 // pred_check
          _
        $region98: #{tpu_custom_call.1} parent=71 // pred_check_branch
          %1108 = sbr.rel (%p1105) target = $region100
        $region99: #{tpu_custom_call.1} parent=71 // pred_region
          %vm1109 = vcmask 0
          %1110 = vst.msk [vmem:[#allocation2] sm:$0x1] %vm1109, -1e+30
          %1111 = vst.msk [vmem:[#allocation3] sm:$0x1] %vm1109, 0.0
        $region100: #{tpu_custom_call.1} parent=71 // pred_fallthru
          _
        // Predicated region
        $region101: #{tpu_custom_call.1} parent=71 // pred_check
          %p1112 = pneg %p1103
        $region102: #{tpu_custom_call.1} parent=71 // pred_check_branch
          %1114 = sbr.rel (%p1112) target = $region104
        $region103: #{tpu_custom_call.1} parent=71 // pred_region
          %v1115 = vmax.f32 %v1101, %v1102
          %v1116 = vrot.slane %v1115, 4
          %v1117 = vmax.f32 %v1115, %v1116
          %v1118 = vrot.slane %v1117, 2
          %v1119 = vmax.f32 %v1117, %v1118
          %v1120 = vrot.slane %v1119, 1
          %v1121 = vmax.f32 %v1119, %v1120
          %v1122 = vld [vmem:[#allocation2] sm:$0x1]
          %v1123 = vmax.f32 %v1122, %v1121
          %v1124 = vld [vmem:[#allocation3] sm:$0x1]
          %v1125 = vsub.f32 %v1122, %v1123
          %v1126 = vmul.f32 %v1125, 1.442695
          %v1127 = vpow.pop %v1126
          %v1128 = vmul.f32 %v1124, %v1127
          %v1130 = vlaneseq
          %v1131 = vshrl.u32 %v1130, 7
          %v1132 = vsub.s32 0, %v1131
          %v1133 = vrot.slane %v1123, %v1132
          %v1135 = vsub.f32 %v1101, %v1133
          %v1136 = vsub.f32 %v1102, %v1133
          %v1137 = vmul.f32 %v1135, 1.442695
          %v1138 = vpow.pop %v1137
          %v1139 = vmul.f32 %v1136, 1.442695
          %v1140 = vpow.pop %v1139
          %v1141 = vmul.f32 %v1138, %v553
          %v1142 = vmul.f32 %v1140, %v554
          %vm1143 = vcmask 7168
          %v1144 = vsel %vm1143, %v1141, 0.0
          %v1145 = vsel %vm1143, %v1142, 0.0
          %v1146 = vadd.f32 %v1144, %v1145
          %v1147 = vrot.slane %v1146, 4
          %v1148 = vadd.f32 %v1146, %v1147
          %v1149 = vrot.slane %v1148, 2
          %v1150 = vadd.f32 %v1148, %v1149
          %v1151 = vrot.slane %v1150, 1
          %v1152 = vadd.f32 %v1150, %v1151
          %v1153 = vadd.f32 %v1128, %v1152
          %vm1154 = vcmask 0
          %1155 = vst.msk [vmem:[#allocation3] sm:$0x1] %vm1154, %v1153
          %1156 = vst.msk [vmem:[#allocation2] sm:$0x1] %vm1154, %v1123
        $region104: #{tpu_custom_call.1} parent=71 // pred_fallthru
          _
        %p1157 = scmp.eq.s32.totalorder %s35, 1
        // Predicated region
        $region105: #{tpu_custom_call.1} parent=71 // pred_check
          %p1158 = pneg %p1157
        $region106: #{tpu_custom_call.1} parent=71 // pred_check_branch
          %1160 = sbr.rel (%p1158) target = $region108
        $region107: #{tpu_custom_call.1} parent=71 // pred_region
          %v1161 = vld [vmem:[#allocation2] sm:$0x1]
          %v1163 = vlaneseq
          %v1164 = vshrl.u32 %v1163, 7
          %v1165 = vsub.s32 0, %v1164
          %v1166 = vrot.slane %v1161, %v1165
          %v1168 = vsub.f32 %v1101, %v1166
          %v1169 = vsub.f32 %v1102, %v1166
          %v1170 = vmul.f32 %v1168, 1.442695
          %v1171 = vpow.pop %v1170
          %v1172 = vmul.f32 %v1169, 1.442695
          %v1173 = vpow.pop %v1172
          %v1174 = vld [vmem:[#allocation3] sm:$0x1]
          %v1176 = vlaneseq
          %v1177 = vshrl.u32 %v1176, 7
          %v1178 = vsub.s32 0, %v1177
          %v1179 = vrot.slane %v1174, %v1178
          %v1181 = vrcp.pop %v1179
          %v1182 = vmul.f32 %v1171, %v1181
          %v1183 = vmul.f32 %v1173, %v1181
          %v1184 = vmul.f32 %v1182, %v553
          %v1185 = vmul.f32 %v1183, %v554
          %1187 = vset.pattern.permute.xlu0 0
          %1188 = vperm.xlu0 %1187, %v1184
          %v1189 = vpop.permute.xlu0 %1188
          %1192 = vset.pattern.permute.xlu0 0
          %1193 = vperm.xlu0 %1192, %v1185
          %v1194 = vpop.permute.xlu0 %1193
          %v1196 = vmul.f32 %v1189, %v1069
          %v1197 = vmul.f32 %v1194, %v1073
          %v1198 = vadd.f32 %v929, %v1196
          %v1199 = vadd.f32 %v933, %v1197
          %v1200 = vld [vmem:[%s10] sm:$0x1]
          %v1202 = vlaneseq
          %v1203 = vshrl.u32 %v1202, 7
          %v1204 = vsub.s32 0, %v1203
          %v1205 = vrot.slane %v1200, %v1204
          %v1207 = vadd.f32 %v1198, %v1205
          %v1208 = vadd.f32 %v1199, %v1205
          %v1209 = vlaneseq
          %v1210 = vand.u32 %v1209, 127
          %vm1211 = vcmp.lt.s32.totalorder %v1210, 16
          %v1212 = vsel %vm1211, 1, 0
          %v1213 = vcvt.s32.f32 %v1212
          %1214 = vadd.xlane.f32.xlu0 %v1207
          %v1215 = vpop.xlane.xlu0 %1214
          %1216 = vadd.xlane.f32.xlu0 %v1208
          %v1217 = vpop.xlane.xlu0 %1216
          %v1218 = vmul.f32 %v1215, 0.0625
          %v1219 = vmul.f32 %v1217, 0.0625
          %v1220 = vsub.f32 %v1207, %v1218
          %v1221 = vsub.f32 %v1208, %v1219
          %v1222 = vmul.f32 %v1220, %v1213
          %v1223 = vmul.f32 %v1221, %v1213
          %v1224 = vmul.f32 %v1222, %v1222
          %v1225 = vmul.f32 %v1223, %v1223
          %1226 = vadd.xlane.f32.xlu0 %v1224
          %v1227 = vpop.xlane.xlu0 %1226
          %1228 = vadd.xlane.f32.xlu0 %v1225
          %v1229 = vpop.xlane.xlu0 %1228
          %v1230 = vmul.f32 %v1227, 0.0625
          %v1231 = vmul.f32 %v1229, 0.0625
          %v1232 = vadd.f32 %v1230, 1e-05
          %v1233 = vadd.f32 %v1231, 1e-05
          %v1234 = vrsqrt.pop %v1232
          %v1235 = vrsqrt.pop %v1233
          %v1236 = vmul.f32 %v1222, %v1234
          %v1237 = vmul.f32 %v1223, %v1235
          %v1238 = vld [vmem:[%s11] sm:$0x1]
          %v1240 = vlaneseq
          %v1241 = vshrl.u32 %v1240, 7
          %v1242 = vsub.s32 0, %v1241
          %v1243 = vrot.slane %v1238, %v1242
          %v1245 = vmul.f32 %v1236, %v1243
          %v1246 = vmul.f32 %v1237, %v1243
          %v1247 = vld [vmem:[%s12] sm:$0x1]
          %v1249 = vlaneseq
          %v1250 = vshrl.u32 %v1249, 7
          %v1251 = vsub.s32 0, %v1250
          %v1252 = vrot.slane %v1247, %v1251
          %v1254 = vadd.f32 %v1245, %v1252
          %v1255 = vadd.f32 %v1246, %v1252
          %v1256 = vmax.f32 %v1254, 0.0
          %v1257 = vmax.f32 %v1255, 0.0
          %1258 = vst [vmem:[%s536] sm:$0xff] %v1256
          %1259 = vst [vmem:[%s536 + $0x8] sm:$0xff] %v1257
        $region108: #{tpu_custom_call.1} parent=71 // pred_fallthru
          _
        %s1260 = sand.u32 %s336, 1
        %s1261 = scalar_lea.sflag [#allocation6], %s1260
        %s1262 = sand.u32 %s336, 1
        %s1263 = smul.addr %s1262, 16
        %s1264 = scalar_lea.vmem [#allocation15], %s1263
        // Predicated region
        $region109: #{tpu_custom_call.1} parent=71 // pred_check
          %p1265 = pneg %p346
        $region110: #{tpu_custom_call.1} parent=71 // pred_check_branch
          %1267 = sbr.rel (%p1265) target = $region112
        $region111: #{tpu_custom_call.1} parent=71 // pred_region
          %s1268 = smul.u32 %s35, %s36
          %s1269 = smul.u32 2, %s1268
          %s1271 = ssub.s32 256, 256
          %1272 = vsyncadd %s1261, %s1271
          %s1273 = smul.addr %s1269, 128
          %s1274 = scalar_lea.hbm %s13, %s1273
          %s1275 = sshll.u32 %s1264, 4
          %s1276 = int_to_ptr.vmem [resolvable:$true] %s1275
          %1281 = dma.vmem_to_hbm [thread:$0]  %s1276, 256, %s1274, %s1261, 128, 128, 8
        $region112: #{tpu_custom_call.1} parent=71 // pred_fallthru
          _
      $region72: #{tpu_custom_call.1} parent=5 // pred_fallthru
        _
      %p1282 = scmp.le.s32.totalorder 2, %s26
      // Predicated region
      $region113: #{tpu_custom_call.1} parent=5 // pred_check
        %p1283 = pneg %p1282
      $region114: #{tpu_custom_call.1} parent=5 // pred_check_branch
        %1285 = sbr.rel (%p1283) target = $region116
      $region115: #{tpu_custom_call.1} parent=5 // pred_region
        %s1286 = ssub.s32 %s26, 2
        // Predicated region
        $region117: #{tpu_custom_call.1} parent=115 // pred_check
          %p1287 = pneg %p352
        $region118: #{tpu_custom_call.1} parent=115 // pred_check_branch
          %1289 = sbr.rel (%p1287) target = $region120
        $region119: #{tpu_custom_call.1} parent=115 // pred_region
          %s1290 = sand.u32 %s337, 1
          %s1291 = scalar_lea.sflag [#allocation6], %s1290
          %s1292 = sand.u32 %s337, 1
          %s1293 = smul.addr %s1292, 16
          %s1294 = scalar_lea.vmem [#allocation15], %s1293
          %1295 = dma.done %s1291, 256
        $region120: #{tpu_custom_call.1} parent=115 // pred_fallthru
          _
      $region116: #{tpu_custom_call.1} parent=5 // pred_fallthru
        _
    $region6: #{tpu_custom_call.1} parent=1 // loop_footer
      %s30 = sadd.s32 1, %s26
    $region7: #{tpu_custom_call.1} parent=1 // loop_footer_branch
      %25 = sbr.rel target = $region3
    $region8: #{tpu_custom_call.1} parent=1 // loop_exit
      _
    %1296 = vsyncpa [#allocation5], 1
    %s1297 = scalar_lea.sflag [#allocation5], 1
    %1298 = vsyncpa %s1297, 1
    %1299 = vsyncpa [#allocation8], 1
    %1300 = vsyncpa [#allocation11], 1
    %1301 = vsyncpa [#allocation14], 1
    %1302 = vsyncpa [#allocation6], 1
    %s1303 = scalar_lea.sflag [#allocation6], 1
    %1304 = vsyncpa %s1303, 1

</llo_original>
